<compile_context>
chip_gen: v6e
topology: v6e:2x2x1
jax: 0.10.0
libtpu: 0.0.40
codegen_flags: <defaults>
</compile_context>

<pallas_src>
import jax
import jax.numpy as jnp
from jax import lax
from jax.experimental import pallas as pl
from jax.experimental.pallas import tpu as pltpu


def _basemodel_kernel(uid_ref, iid_ref,            # [TM, 1] int32 ids
                      utab_ref, itab_ref,          # [NU, DU], [NI, DI] bf16 tables
                      wu_ref, bu_ref,              # user_embedding
                      wi_ref, bi_ref,              # item_embedding
                      w1_ref, b1_ref,              # rec_model layer 1 (merged [2H, H])
                      w2_ref, b2_ref,              # rec_model layer 2 ([1, H] row, [1, 1])
                      eui_ref, rec_ref):           # outputs: [TM, 2H], [TM, 1]
    H = wu_ref.shape[1]
    TM = uid_ref.shape[0]
    NU = utab_ref.shape[0]
    NI = itab_ref.shape[0]
    cdt = utab_ref.dtype                           # bf16 MXU compute dtype

    # ---- fused user_load / item_load: one-hot gather on the MXU -----------
    uids = uid_ref[...]                            # [TM, 1] int32
    iids = iid_ref[...]
    u_oh = jnp.where(lax.broadcasted_iota(jnp.int32, (TM, NU), 1) == uids,
                     1.0, 0.0).astype(cdt)         # [TM, NU]
    i_oh = jnp.where(lax.broadcasted_iota(jnp.int32, (TM, NI), 1) == iids,
                     1.0, 0.0).astype(cdt)         # [TM, NI]
    pu = jnp.dot(u_oh, utab_ref[...],
                 preferred_element_type=jnp.float32).astype(cdt)   # exact rows
    pi = jnp.dot(i_oh, itab_ref[...],
                 preferred_element_type=jnp.float32).astype(cdt)

    # ---- user_embedding / item_embedding: Linear + ReLU (f32 elementwise) --
    eu = jnp.dot(pu, wu_ref[...], preferred_element_type=jnp.float32)
    eu = jnp.maximum(eu + bu_ref[...], 0.0)
    ei = jnp.dot(pi, wi_ref[...], preferred_element_type=jnp.float32)
    ei = jnp.maximum(ei + bi_ref[...], 0.0)

    # lane-dense packed output slab [TM, 2H] = [eu | ei]
    eui_ref[:, :H] = eu.astype(eui_ref.dtype)
    eui_ref[:, H:] = ei.astype(eui_ref.dtype)

    # ---- rec_model: MLP on concat(eu, ei) ----------------------------------
    # single K=2H matmul against the merged first-layer weight
    x1 = eui_ref[...].astype(w1_ref.dtype)                         # [TM, 2H] bf16
    h = jnp.dot(x1, w1_ref[...], preferred_element_type=jnp.float32)
    h = jnp.maximum(h + b1_ref[...], 0.0)
    # final Linear(H, 1) as multiply + lane reduce (avoids a 1-column MXU pass)
    rec = jnp.sum(h * w2_ref[...], axis=-1, keepdims=True) + b2_ref[...]
    rec_ref[...] = rec.astype(rec_ref.dtype)


def basemodel_forward(user_ids, item_ids, user_table, item_table, params, *, tm=128):
    """Fused BaseModel forward: (user, item) ids -> (eu, ei, rec_value).

    tm: batch tile.  128 saturates v5e's 4x128 MXU; use 256 on v6e/v7x if the
    batch is large (still far under v7x's 64 MiB VMEM with resident weights).
    """
    B = int(user_ids.shape[0])
    NU, DU = user_table.shape
    NI, DI = item_table.shape
    H = int(params["wu"].shape[1])
    assert B % tm == 0, "demo keeps B a multiple of the batch tile (pad otherwise)"
    nb = B // tm

    cdt = jnp.bfloat16
    f32 = jnp.float32
    utab = user_table.astype(cdt)
    itab = item_table.astype(cdt)
    wu = params["wu"].astype(cdt)
    wi = params["wi"].astype(cdt)
    w1 = jnp.concatenate([params["w1u"], params["w1i"]], axis=0).astype(cdt)  # [2H, H]
    bu = params["bu"].astype(f32)
    bi = params["bi"].astype(f32)
    b1 = params["b1"].astype(f32)
    w2r = params["w2"].reshape(1, H).astype(f32)        # row vector for the reduce
    b2 = params["b2"].reshape(1, 1).astype(f32)

    uid2 = user_ids.reshape(B, 1).astype(jnp.int32)
    iid2 = item_ids.reshape(B, 1).astype(jnp.int32)

    # Explicit index maps (no late-binding lambdas in a comprehension).
    def batch_tile(i):
        return (i, 0)

    def resident(i):       # weights / tables: same block every step -> stay in VMEM
        return (0, 0)

    in_specs = [
        pl.BlockSpec((tm, 1), batch_tile),        # user ids
        pl.BlockSpec((tm, 1), batch_tile),        # item ids
        pl.BlockSpec((NU, DU), resident),         # user profile table
        pl.BlockSpec((NI, DI), resident),         # item profile table
        pl.BlockSpec((DU, H), resident),          # wu
        pl.BlockSpec((1, H), resident),           # bu
        pl.BlockSpec((DI, H), resident),          # wi
        pl.BlockSpec((1, H), resident),           # bi
        pl.BlockSpec((2 * H, H), resident),       # w1 (merged)
        pl.BlockSpec((1, H), resident),           # b1
        pl.BlockSpec((1, H), resident),           # w2 row
        pl.BlockSpec((1, 1), resident),           # b2
    ]
    out_shapes = (
        jax.ShapeDtypeStruct((B, 2 * H), f32),    # [eu | ei] packed slab
        jax.ShapeDtypeStruct((B, 1), f32),        # rec_value
    )
    out_specs = (
        pl.BlockSpec((tm, 2 * H), batch_tile),
        pl.BlockSpec((tm, 1), batch_tile),
    )

    flops = int(2 * B * (NU * DU + NI * DI + DU * H + DI * H + 2 * H * H + H))
    bytes_accessed = int(
        2 * B * 4                                           # ids
        + (NU * DU + NI * DI) * 2                           # tables (bf16)
        + (DU * H + DI * H + 2 * H * H) * 2                 # weights (bf16)
        + (4 * H + 1) * 4                                   # biases + w2 row (f32)
        + (B * 2 * H + B) * 4                               # outputs (f32)
    )

    eui, rec = pl.pallas_call(
        _basemodel_kernel,
        out_shape=out_shapes,
        grid=(nb,),
        in_specs=in_specs,
        out_specs=out_specs,
        compiler_params=pltpu.CompilerParams(
            dimension_semantics=("parallel",),    # v7x: shard tiles across 2 TCs
        ),
        cost_estimate=pl.CostEstimate(
            flops=flops, transcendentals=0, bytes_accessed=bytes_accessed),
    )(uid2, iid2, utab, itab, wu, bu, wi, bi, w1, b1, w2r, b2)

    eu = eui[:, :H]
    ei = eui[:, H:]
    return eu, ei, rec


def make_params(key, du, di, hidden):
    """Deterministic synthetic parameters matching the module's structure."""
    ks = jax.random.split(key, 8)
    scale = 0.1
    return {
        # user_embedding: Linear(Du, H)
        "wu": scale * jax.random.normal(ks[0], (du, hidden), jnp.float32),
        "bu": scale * jax.random.normal(ks[1], (1, hidden), jnp.float32),
        # item_embedding: Linear(Di, H)
        "wi": scale * jax.random.normal(ks[2], (di, hidden), jnp.float32),
        "bi": scale * jax.random.normal(ks[3], (1, hidden), jnp.float32),
        # rec_model layer 1: Linear(2H, H), stored split for the eu / ei halves
        "w1u": scale * jax.random.normal(ks[4], (hidden, hidden), jnp.float32),
        "w1i": scale * jax.random.normal(ks[5], (hidden, hidden), jnp.float32),
        "b1": scale * jax.random.normal(ks[6], (1, hidden), jnp.float32),
        # rec_model layer 2: Linear(H, 1)
        "w2": scale * jax.random.normal(ks[7], (hidden, 1), jnp.float32),
        "b2": jnp.zeros((1, 1), jnp.float32),
    }


if __name__ == "__main__":
    key = jax.random.PRNGKey(0)
    k_tab_u, k_tab_i, k_ids, k_params = jax.random.split(key, 4)

    B = 256            # batch of (user, item) pairs -> grid of 2 x 128-row tiles
    NUM_USERS = 256
    NUM_ITEMS = 512
    DU = 128           # raw user profile dim (lane-dense)
    DI = 128           # raw item profile dim
    H = 128            # embedding / hidden dim (lane-dense)

    user_table = jax.random.normal(k_tab_u, (NUM_USERS, DU), jnp.float32)
    item_table = jax.random.normal(k_tab_i, (NUM_ITEMS, DI), jnp.float32)
    k_u, k_i = jax.random.split(k_ids)
    user_ids = jax.random.randint(k_u, (B,), 0, NUM_USERS)
    item_ids = jax.random.randint(k_i, (B,), 0, NUM_ITEMS)

    params = make_params(k_params, DU, DI, H)

    eu, ei, rec_value = jax.jit(basemodel_forward)(
        user_ids, item_ids, user_table, item_table, params)
    jax.block_until_ready((eu, ei, rec_value))

    # Pure-JAX reference on the same bf16-rounded operands (f32 math / f32 bias).
    bf, f32 = jnp.bfloat16, jnp.float32
    utab_q = user_table.astype(bf).astype(f32)
    itab_q = item_table.astype(bf).astype(f32)
    wu_q = params["wu"].astype(bf).astype(f32)
    wi_q = params["wi"].astype(bf).astype(f32)
    w1_q = jnp.concatenate([params["w1u"], params["w1i"]], 0).astype(bf).astype(f32)
    pu_r = utab_q[user_ids]
    pi_r = itab_q[item_ids]
    eu_r = jnp.maximum(pu_r @ wu_q + params["bu"], 0.0)
    ei_r = jnp.maximum(pi_r @ wi_q + params["bi"], 0.0)
    x1_r = jnp.concatenate([eu_r, ei_r], -1).astype(bf).astype(f32)
    h_r = jnp.maximum(x1_r @ w1_q + params["b1"], 0.0)
    rec_r = h_r @ params["w2"] + params["b2"]

    assert eu.shape == (B, H) and ei.shape == (B, H) and rec_value.shape == (B, 1)
    assert jnp.allclose(eu, eu_r, atol=1e-2, rtol=1e-2)
    assert jnp.allclose(ei, ei_r, atol=1e-2, rtol=1e-2)
    assert jnp.allclose(rec_value, rec_r, atol=1e-2, rtol=1e-2)

    print("KERNEL_OK")
</pallas_src>

<mosaic_0001>
module attributes {stable_mosaic.version = 11 : i64} {
  func.func @_basemodel_kernel(%arg0: i32, %arg1: memref<128x1xi32, #tpu.memory_space<vmem>>, %arg2: memref<128x1xi32, #tpu.memory_space<vmem>>, %arg3: memref<256x128xbf16, #tpu.memory_space<vmem>>, %arg4: memref<512x128xbf16, #tpu.memory_space<vmem>>, %arg5: memref<128x128xbf16, #tpu.memory_space<vmem>>, %arg6: memref<1x128xf32, #tpu.memory_space<vmem>>, %arg7: memref<128x128xbf16, #tpu.memory_space<vmem>>, %arg8: memref<1x128xf32, #tpu.memory_space<vmem>>, %arg9: memref<256x128xbf16, #tpu.memory_space<vmem>>, %arg10: memref<1x128xf32, #tpu.memory_space<vmem>>, %arg11: memref<1x128xf32, #tpu.memory_space<vmem>>, %arg12: memref<1x1xf32, #tpu.memory_space<vmem>>, %arg13: memref<128x256xf32, #tpu.memory_space<vmem>>, %arg14: memref<128x1xf32, #tpu.memory_space<vmem>>) attributes {dimension_semantics = [#tpu.dimension_semantics<parallel>], iteration_bounds = array<i64: 2>, scalar_prefetch = 0 : i64, scratch_operands = 0 : i64, tpu.core_type = #tpu.core_type<tc>, window_params = [{transform_indices = @transform_0, window_bounds = array<i64: 128, 1>}, {transform_indices = @transform_1, window_bounds = array<i64: 128, 1>}, {pipeline_mode = #tpu.pipeline_mode<synchronous>, transform_indices = @transform_2, window_bounds = array<i64: 256, 128>}, {pipeline_mode = #tpu.pipeline_mode<synchronous>, transform_indices = @transform_3, window_bounds = array<i64: 512, 128>}, {pipeline_mode = #tpu.pipeline_mode<synchronous>, transform_indices = @transform_4, window_bounds = array<i64: 128, 128>}, {pipeline_mode = #tpu.pipeline_mode<synchronous>, transform_indices = @transform_5, window_bounds = array<i64: 1, 128>}, {pipeline_mode = #tpu.pipeline_mode<synchronous>, transform_indices = @transform_6, window_bounds = array<i64: 128, 128>}, {pipeline_mode = #tpu.pipeline_mode<synchronous>, transform_indices = @transform_7, window_bounds = array<i64: 1, 128>}, {pipeline_mode = #tpu.pipeline_mode<synchronous>, transform_indices = @transform_8, window_bounds = array<i64: 256, 128>}, {pipeline_mode = #tpu.pipeline_mode<synchronous>, transform_indices = @transform_9, window_bounds = array<i64: 1, 128>}, {pipeline_mode = #tpu.pipeline_mode<synchronous>, transform_indices = @transform_10, window_bounds = array<i64: 1, 128>}, {pipeline_mode = #tpu.pipeline_mode<synchronous>, transform_indices = @transform_11, window_bounds = array<i64: 1, 1>}, {transform_indices = @transform_12, window_bounds = array<i64: 128, 256>}, {transform_indices = @transform_13, window_bounds = array<i64: 128, 1>}]} {
    %c0 = arith.constant 0 : index
    %c0_0 = arith.constant 0 : index
    %0 = vector.load %arg1[%c0, %c0_0] : memref<128x1xi32, #tpu.memory_space<vmem>>, vector<128x1xi32>
    %c0_1 = arith.constant 0 : index
    %c0_2 = arith.constant 0 : index
    %1 = vector.load %arg2[%c0_1, %c0_2] : memref<128x1xi32, #tpu.memory_space<vmem>>, vector<128x1xi32>
    %2 = tpu.iota {dimensions = array<i32: 1>} : vector<128x256xi32>
    %3 = vector.broadcast %0 : vector<128x1xi32> to vector<128x256xi32>
    %4 = arith.cmpi eq, %2, %3 : vector<128x256xi32>
    %cst = arith.constant 1.000000e+00 : f32
    %cst_3 = arith.constant 0.000000e+00 : f32
    %5 = vector.broadcast %cst : f32 to vector<128x256xf32>
    %6 = vector.broadcast %cst_3 : f32 to vector<128x256xf32>
    %7 = arith.select %4, %5, %6 : vector<128x256xi1>, vector<128x256xf32>
    %8 = arith.truncf %7 : vector<128x256xf32> to vector<128x256xbf16>
    %9 = tpu.iota {dimensions = array<i32: 1>} : vector<128x512xi32>
    %10 = vector.broadcast %1 : vector<128x1xi32> to vector<128x512xi32>
    %11 = arith.cmpi eq, %9, %10 : vector<128x512xi32>
    %cst_4 = arith.constant 1.000000e+00 : f32
    %cst_5 = arith.constant 0.000000e+00 : f32
    %12 = vector.broadcast %cst_4 : f32 to vector<128x512xf32>
    %13 = vector.broadcast %cst_5 : f32 to vector<128x512xf32>
    %14 = arith.select %11, %12, %13 : vector<128x512xi1>, vector<128x512xf32>
    %15 = arith.truncf %14 : vector<128x512xf32> to vector<128x512xbf16>
    %c0_6 = arith.constant 0 : index
    %c0_7 = arith.constant 0 : index
    %16 = vector.load %arg3[%c0_6, %c0_7] : memref<256x128xbf16, #tpu.memory_space<vmem>>, vector<256x128xbf16>
    %cst_8 = arith.constant dense<0.000000e+00> : vector<128x128xf32>
    %17 = tpu.matmul %8, %16, %cst_8 {dimension_numbers = #tpu.dot_dimension_numbers<[1], [0], [0], [1], [0, 0, 1, 1], [], []>} : vector<128x256xbf16>, vector<256x128xbf16>, vector<128x128xf32> -> vector<128x128xf32>
    %18 = arith.truncf %17 : vector<128x128xf32> to vector<128x128xbf16>
    %c0_9 = arith.constant 0 : index
    %c0_10 = arith.constant 0 : index
    %19 = vector.load %arg4[%c0_9, %c0_10] : memref<512x128xbf16, #tpu.memory_space<vmem>>, vector<512x128xbf16>
    %cst_11 = arith.constant dense<0.000000e+00> : vector<128x128xf32>
    %20 = tpu.matmul %15, %19, %cst_11 {dimension_numbers = #tpu.dot_dimension_numbers<[1], [0], [0], [1], [0, 0, 1, 1], [], []>} : vector<128x512xbf16>, vector<512x128xbf16>, vector<128x128xf32> -> vector<128x128xf32>
    %21 = arith.truncf %20 : vector<128x128xf32> to vector<128x128xbf16>
    %c0_12 = arith.constant 0 : index
    %c0_13 = arith.constant 0 : index
    %22 = vector.load %arg5[%c0_12, %c0_13] : memref<128x128xbf16, #tpu.memory_space<vmem>>, vector<128x128xbf16>
    %cst_14 = arith.constant dense<0.000000e+00> : vector<128x128xf32>
    %23 = tpu.matmul %18, %22, %cst_14 {dimension_numbers = #tpu.dot_dimension_numbers<[1], [0], [0], [1], [0, 0, 1, 1], [], []>} : vector<128x128xbf16>, vector<128x128xbf16>, vector<128x128xf32> -> vector<128x128xf32>
    %c0_15 = arith.constant 0 : index
    %c0_16 = arith.constant 0 : index
    %24 = vector.load %arg6[%c0_15, %c0_16] : memref<1x128xf32, #tpu.memory_space<vmem>>, vector<1x128xf32>
    %25 = vector.broadcast %24 : vector<1x128xf32> to vector<128x128xf32>
    %26 = arith.addf %23, %25 : vector<128x128xf32>
    %cst_17 = arith.constant 0.000000e+00 : f32
    %27 = vector.broadcast %cst_17 : f32 to vector<128x128xf32>
    %28 = arith.maximumf %26, %27 : vector<128x128xf32>
    %c0_18 = arith.constant 0 : index
    %c0_19 = arith.constant 0 : index
    %29 = vector.load %arg7[%c0_18, %c0_19] : memref<128x128xbf16, #tpu.memory_space<vmem>>, vector<128x128xbf16>
    %cst_20 = arith.constant dense<0.000000e+00> : vector<128x128xf32>
    %30 = tpu.matmul %21, %29, %cst_20 {dimension_numbers = #tpu.dot_dimension_numbers<[1], [0], [0], [1], [0, 0, 1, 1], [], []>} : vector<128x128xbf16>, vector<128x128xbf16>, vector<128x128xf32> -> vector<128x128xf32>
    %c0_21 = arith.constant 0 : index
    %c0_22 = arith.constant 0 : index
    %31 = vector.load %arg8[%c0_21, %c0_22] : memref<1x128xf32, #tpu.memory_space<vmem>>, vector<1x128xf32>
    %32 = vector.broadcast %31 : vector<1x128xf32> to vector<128x128xf32>
    %33 = arith.addf %30, %32 : vector<128x128xf32>
    %cst_23 = arith.constant 0.000000e+00 : f32
    %34 = vector.broadcast %cst_23 : f32 to vector<128x128xf32>
    %35 = arith.maximumf %33, %34 : vector<128x128xf32>
    %c0_24 = arith.constant 0 : index
    %c0_25 = arith.constant 0 : index
    %36 = vector.load %arg13[%c0_24, %c0_25] : memref<128x256xf32, #tpu.memory_space<vmem>>, vector<128x128xf32>
    tpu.vector_store %arg13[%c0_24, %c0_25], %28 {strides = array<i32>} : memref<128x256xf32, #tpu.memory_space<vmem>>, vector<128x128xf32>,
    %c0_26 = arith.constant 0 : index
    %c128 = arith.constant 128 : index
    %37 = vector.load %arg13[%c0_26, %c128] : memref<128x256xf32, #tpu.memory_space<vmem>>, vector<128x128xf32>
    tpu.vector_store %arg13[%c0_26, %c128], %35 {strides = array<i32>} : memref<128x256xf32, #tpu.memory_space<vmem>>, vector<128x128xf32>,
    %c0_27 = arith.constant 0 : index
    %c0_28 = arith.constant 0 : index
    %38 = vector.load %arg13[%c0_27, %c0_28] : memref<128x256xf32, #tpu.memory_space<vmem>>, vector<128x256xf32>
    %39 = arith.truncf %38 : vector<128x256xf32> to vector<128x256xbf16>
    %c0_29 = arith.constant 0 : index
    %c0_30 = arith.constant 0 : index
    %40 = vector.load %arg9[%c0_29, %c0_30] : memref<256x128xbf16, #tpu.memory_space<vmem>>, vector<256x128xbf16>
    %cst_31 = arith.constant dense<0.000000e+00> : vector<128x128xf32>
    %41 = tpu.matmul %39, %40, %cst_31 {dimension_numbers = #tpu.dot_dimension_numbers<[1], [0], [0], [1], [0, 0, 1, 1], [], []>} : vector<128x256xbf16>, vector<256x128xbf16>, vector<128x128xf32> -> vector<128x128xf32>
    %c0_32 = arith.constant 0 : index
    %c0_33 = arith.constant 0 : index
    %42 = vector.load %arg10[%c0_32, %c0_33] : memref<1x128xf32, #tpu.memory_space<vmem>>, vector<1x128xf32>
    %43 = vector.broadcast %42 : vector<1x128xf32> to vector<128x128xf32>
    %44 = arith.addf %41, %43 : vector<128x128xf32>
    %cst_34 = arith.constant 0.000000e+00 : f32
    %45 = vector.broadcast %cst_34 : f32 to vector<128x128xf32>
    %46 = arith.maximumf %44, %45 : vector<128x128xf32>
    %c0_35 = arith.constant 0 : index
    %c0_36 = arith.constant 0 : index
    %47 = vector.load %arg11[%c0_35, %c0_36] : memref<1x128xf32, #tpu.memory_space<vmem>>, vector<1x128xf32>
    %48 = vector.broadcast %47 : vector<1x128xf32> to vector<128x128xf32>
    %49 = arith.mulf %46, %48 : vector<128x128xf32>
    %cst_37 = arith.constant dense<0.000000e+00> : vector<128xf32>
    %50 = vector.multi_reduction <add>, %49, %cst_37 [1] : vector<128x128xf32> to vector<128xf32>
    %51 = vector.shape_cast %50 : vector<128xf32> to vector<128x1xf32>
    %c0_38 = arith.constant 0 : index
    %c0_39 = arith.constant 0 : index
    %52 = vector.load %arg12[%c0_38, %c0_39] : memref<1x1xf32, #tpu.memory_space<vmem>>, vector<1x1xf32>
    %53 = vector.broadcast %52 : vector<1x1xf32> to vector<128x1xf32>
    %54 = arith.addf %51, %53 : vector<128x1xf32>
    %c0_40 = arith.constant 0 : index
    %c0_41 = arith.constant 0 : index
    %55 = vector.load %arg14[%c0_40, %c0_41] : memref<128x1xf32, #tpu.memory_space<vmem>>, vector<128x1xf32>
    tpu.vector_store %arg14[%c0_40, %c0_41], %54 {strides = array<i32>} : memref<128x1xf32, #tpu.memory_space<vmem>>, vector<128x1xf32>,
    return
  }
  func.func @transform_0(%arg0: i32) -> (i32, i32) {
    %c0_i32 = arith.constant 0 : i32
    %c0_i32_0 = arith.constant 0 : i32
    return %arg0, %c0_i32 : i32, i32
  }
  func.func @transform_1(%arg0: i32) -> (i32, i32) {
    %c0_i32 = arith.constant 0 : i32
    %c0_i32_0 = arith.constant 0 : i32
    return %arg0, %c0_i32 : i32, i32
  }
  func.func @transform_2(%arg0: i32) -> (i32, i32) {
    %c0_i32 = arith.constant 0 : i32
    %c0_i32_0 = arith.constant 0 : i32
    %c0_i32_1 = arith.constant 0 : i32
    return %c0_i32, %c0_i32_0 : i32, i32
  }
  func.func @transform_3(%arg0: i32) -> (i32, i32) {
    %c0_i32 = arith.constant 0 : i32
    %c0_i32_0 = arith.constant 0 : i32
    %c0_i32_1 = arith.constant 0 : i32
    return %c0_i32, %c0_i32_0 : i32, i32
  }
  func.func @transform_4(%arg0: i32) -> (i32, i32) {
    %c0_i32 = arith.constant 0 : i32
    %c0_i32_0 = arith.constant 0 : i32
    %c0_i32_1 = arith.constant 0 : i32
    return %c0_i32, %c0_i32_0 : i32, i32
  }
  func.func @transform_5(%arg0: i32) -> (i32, i32) {
    %c0_i32 = arith.constant 0 : i32
    %c0_i32_0 = arith.constant 0 : i32
    %c0_i32_1 = arith.constant 0 : i32
    return %c0_i32, %c0_i32_0 : i32, i32
  }
  func.func @transform_6(%arg0: i32) -> (i32, i32) {
    %c0_i32 = arith.constant 0 : i32
    %c0_i32_0 = arith.constant 0 : i32
    %c0_i32_1 = arith.constant 0 : i32
    return %c0_i32, %c0_i32_0 : i32, i32
  }
  func.func @transform_7(%arg0: i32) -> (i32, i32) {
    %c0_i32 = arith.constant 0 : i32
    %c0_i32_0 = arith.constant 0 : i32
    %c0_i32_1 = arith.constant 0 : i32
    return %c0_i32, %c0_i32_0 : i32, i32
  }
  func.func @transform_8(%arg0: i32) -> (i32, i32) {
    %c0_i32 = arith.constant 0 : i32
    %c0_i32_0 = arith.constant 0 : i32
    %c0_i32_1 = arith.constant 0 : i32
    return %c0_i32, %c0_i32_0 : i32, i32
  }
  func.func @transform_9(%arg0: i32) -> (i32, i32) {
    %c0_i32 = arith.constant 0 : i32
    %c0_i32_0 = arith.constant 0 : i32
    %c0_i32_1 = arith.constant 0 : i32
    return %c0_i32, %c0_i32_0 : i32, i32
  }
  func.func @transform_10(%arg0: i32) -> (i32, i32) {
    %c0_i32 = arith.constant 0 : i32
    %c0_i32_0 = arith.constant 0 : i32
    %c0_i32_1 = arith.constant 0 : i32
    return %c0_i32, %c0_i32_0 : i32, i32
  }
  func.func @transform_11(%arg0: i32) -> (i32, i32) {
    %c0_i32 = arith.constant 0 : i32
    %c0_i32_0 = arith.constant 0 : i32
    %c0_i32_1 = arith.constant 0 : i32
    return %c0_i32, %c0_i32_0 : i32, i32
  }
  func.func @transform_12(%arg0: i32) -> (i32, i32) {
    %c0_i32 = arith.constant 0 : i32
    %c0_i32_0 = arith.constant 0 : i32
    return %arg0, %c0_i32 : i32, i32
  }
  func.func @transform_13(%arg0: i32) -> (i32, i32) {
    %c0_i32 = arith.constant 0 : i32
    %c0_i32_0 = arith.constant 0 : i32
    return %arg0, %c0_i32 : i32, i32
  }
}

</mosaic_0001>

<llo_original>
// kernel: basemodel_forward.1
$region0: #{basemodel_forward.1}
  #allocation0 [shape = 'u32[]', space=smem, size = 0x4, offset = 0x4, fixed_abs, tag = 'smem constant byte address 0x4 - core index']
  #allocation1 [shape = 'u32[144,128]{1,0:T(1,128)}', space=vmem, size = 0x12000, scoped, tag = 'internal scratch']
  #allocation2 [shape = 'f32[1,1]{1,0:T(1,128)S(1)}', space=vmem, size = 0x200, scoped, tag = 'scoped memory for basemodel_forward.1']
  %s0 = inlined_call_operand.vmem [shape: s32[256,1], index: 0, kind: input, shape index: {}]
  %s1 = inlined_call_operand.vmem [shape: s32[256,1], index: 1, kind: input, shape index: {}]
  %s2 = inlined_call_operand.vmem [shape: bf16[256,128], index: 2, kind: input, shape index: {}]
  %s3 = inlined_call_operand.vmem [shape: bf16[512,128], index: 3, kind: input, shape index: {}]
  %s4 = inlined_call_operand.vmem [shape: bf16[128,128], index: 4, kind: input, shape index: {}]
  %s5 = inlined_call_operand.vmem [shape: f32[1,128], index: 5, kind: input, shape index: {}]
  %s6 = inlined_call_operand.vmem [shape: bf16[128,128], index: 6, kind: input, shape index: {}]
  %s7 = inlined_call_operand.vmem [shape: f32[1,128], index: 7, kind: input, shape index: {}]
  %s8 = inlined_call_operand.vmem [shape: bf16[256,128], index: 8, kind: input, shape index: {}]
  %s9 = inlined_call_operand.vmem [shape: f32[1,128], index: 9, kind: input, shape index: {}]
  %s10 = inlined_call_operand.vmem [shape: f32[1,128], index: 10, kind: input, shape index: {}]
  %s11 = inlined_call_operand.<no memory space> [shape: f32[1,1], index: 11, kind: input, shape index: {}]
  %s12 = inlined_call_operand.vmem [shape: f32[256,256], index: 12, kind: output, shape index: {0}]
  %s13 = inlined_call_operand.vmem [shape: f32[256,1], index: 13, kind: output, shape index: {1}]
  %14 = xla_tuple %s12, %s13
  %s15 = sld [smem:[#allocation0]]
  $region89: #{basemodel_forward.1} parent=0
    _
  %s17 = ssub.s32 1, %s15
  %s18 = scalar_select 0, %s17, %s15
  %v19 = vstv %s11
  %20 = vst [vmem:[#allocation2] sm:$0x1] %v19
  loop: start=0, step=1, limit=4
  $region2: #{basemodel_forward.1} parent=0 // loop_pre_header
    _
  $region3: #{basemodel_forward.1} parent=0 // loop_header
    %s22 = sphi 0, %s26
    %p23 = scmp.ge.s32.totalorder %s22, 4
    %s32 = sphi 0, %s34
    %s35 = sphi 0, %s32
    %s36 = sphi 0, %s35
    %s52 = sphi 0, %s36
    %s58 = sphi 0, %s60
    %s61 = sphi 0, %s58
    %s62 = sphi 0, %s61
    %s78 = sphi 0, %s62
    %s82 = sphi 0, %s82
    %s84 = sphi 0, %s82
    %s85 = sphi 0, %s84
    %s99 = sphi 0, %s85
    %s103 = sphi 0, %s103
    %s105 = sphi 0, %s103
    %s106 = sphi 0, %s105
    %s120 = sphi 0, %s106
    %s124 = sphi 0, %s124
    %s126 = sphi 0, %s124
    %s127 = sphi 0, %s126
    %s141 = sphi 0, %s127
    %s145 = sphi 0, %s145
    %s147 = sphi 0, %s145
    %s148 = sphi 0, %s147
    %s162 = sphi 0, %s148
    %s166 = sphi 0, %s166
    %s168 = sphi 0, %s166
    %s169 = sphi 0, %s168
    %s183 = sphi 0, %s169
    %s187 = sphi 0, %s187
    %s189 = sphi 0, %s187
    %s190 = sphi 0, %s189
    %s204 = sphi 0, %s190
    %s208 = sphi 0, %s208
    %s210 = sphi 0, %s208
    %s211 = sphi 0, %s210
    %s225 = sphi 0, %s211
    %s229 = sphi 0, %s229
    %s231 = sphi 0, %s229
    %s232 = sphi 0, %s231
    %s246 = sphi 0, %s232
    %s250 = sphi 0, %s250
    %s252 = sphi 0, %s250
    %s253 = sphi 0, %s252
    %s267 = sphi 0, %s253
    %s271 = sphi 0, %s271
    %s273 = sphi 0, %s271
    %s274 = sphi 0, %s273
    %s288 = sphi 0, %s274
    %s294 = sphi 0, %s296
    %s297 = sphi 0, %s294
    %s298 = sphi 0, %s297
    %s314 = sphi 0, %s298
    %s320 = sphi 0, %s322
    %s323 = sphi 0, %s320
    %s324 = sphi 0, %s323
    %s340 = sphi 0, %s324
  $region4: #{basemodel_forward.1} parent=0 // loop_header_branch
    %25 = sbr.rel (%p23) target = $region8
  $region5: #{basemodel_forward.1} parent=0 // loop_body
    %s27 = ssub.s32 %s22, 1
    %s28 = ssub.s32 %s22, 2
    %s29 = sadd.s32 %s22, 1
    %s30 = ssub.s32 %s22, %s29
    %p31 = scmp.eq.s32.totalorder %s30, 0
    %s33 = sadd.s32 %s32, 1
    %s34 = scalar_select %p31, %s32, %s33
    %p37 = pneg %p31
    %p38 = scmp.eq.s32.totalorder %s22, 1
    %p39 = por %p37, %p38
    %p40 = scmp.ne.s32.totalorder %s32, %s35
    %p41 = scmp.eq.s32.totalorder %s22, 0
    %p42 = por %p40, %p41
    %p43 = scmp.ne.s32.totalorder %s32, %s35
    %p44 = scmp.eq.s32.totalorder %s27, 1
    %p45 = por %p43, %p44
    %p46 = scmp.ne.s32.totalorder %s35, %s36
    %p47 = scmp.eq.s32.totalorder %s27, 0
    %p48 = por %p46, %p47
    %p49 = scmp.ne.s32.totalorder %s35, %s36
    %p50 = scmp.eq.s32.totalorder %s28, 1
    %p51 = por %p49, %p50
    %p53 = scmp.ne.s32.totalorder %s36, %s52
    %p54 = scmp.eq.s32.totalorder %s28, 0
    %p55 = por %p53, %p54
    %s56 = ssub.s32 %s22, %s29
    %p57 = scmp.eq.s32.totalorder %s56, 0
    %s59 = sadd.s32 %s58, 1
    %s60 = scalar_select %p57, %s58, %s59
    %p63 = pneg %p57
    %p64 = scmp.eq.s32.totalorder %s22, 1
    %p65 = por %p63, %p64
    %p66 = scmp.ne.s32.totalorder %s58, %s61
    %p67 = scmp.eq.s32.totalorder %s22, 0
    %p68 = por %p66, %p67
    %p69 = scmp.ne.s32.totalorder %s58, %s61
    %p70 = scmp.eq.s32.totalorder %s27, 1
    %p71 = por %p69, %p70
    %p72 = scmp.ne.s32.totalorder %s61, %s62
    %p73 = scmp.eq.s32.totalorder %s27, 0
    %p74 = por %p72, %p73
    %p75 = scmp.ne.s32.totalorder %s61, %s62
    %p76 = scmp.eq.s32.totalorder %s28, 1
    %p77 = por %p75, %p76
    %p79 = scmp.ne.s32.totalorder %s62, %s78
    %p80 = scmp.eq.s32.totalorder %s28, 0
    %p81 = por %p79, %p80
    %s83 = sadd.s32 %s82, 1
    %p86 = scmp.eq.s32.totalorder %s22, 1
    %p87 = scmp.ne.s32.totalorder %s82, %s84
    %p88 = scmp.eq.s32.totalorder %s22, 0
    %p89 = por %p87, %p88
    %p90 = scmp.ne.s32.totalorder %s82, %s84
    %p91 = scmp.eq.s32.totalorder %s27, 1
    %p92 = por %p90, %p91
    %p93 = scmp.ne.s32.totalorder %s84, %s85
    %p94 = scmp.eq.s32.totalorder %s27, 0
    %p95 = por %p93, %p94
    %p96 = scmp.ne.s32.totalorder %s84, %s85
    %p97 = scmp.eq.s32.totalorder %s28, 1
    %p98 = por %p96, %p97
    %p100 = scmp.ne.s32.totalorder %s85, %s99
    %p101 = scmp.eq.s32.totalorder %s28, 0
    %p102 = por %p100, %p101
    %s104 = sadd.s32 %s103, 1
    %p107 = scmp.eq.s32.totalorder %s22, 1
    %p108 = scmp.ne.s32.totalorder %s103, %s105
    %p109 = scmp.eq.s32.totalorder %s22, 0
    %p110 = por %p108, %p109
    %p111 = scmp.ne.s32.totalorder %s103, %s105
    %p112 = scmp.eq.s32.totalorder %s27, 1
    %p113 = por %p111, %p112
    %p114 = scmp.ne.s32.totalorder %s105, %s106
    %p115 = scmp.eq.s32.totalorder %s27, 0
    %p116 = por %p114, %p115
    %p117 = scmp.ne.s32.totalorder %s105, %s106
    %p118 = scmp.eq.s32.totalorder %s28, 1
    %p119 = por %p117, %p118
    %p121 = scmp.ne.s32.totalorder %s106, %s120
    %p122 = scmp.eq.s32.totalorder %s28, 0
    %p123 = por %p121, %p122
    %s125 = sadd.s32 %s124, 1
    %p128 = scmp.eq.s32.totalorder %s22, 1
    %p129 = scmp.ne.s32.totalorder %s124, %s126
    %p130 = scmp.eq.s32.totalorder %s22, 0
    %p131 = por %p129, %p130
    %p132 = scmp.ne.s32.totalorder %s124, %s126
    %p133 = scmp.eq.s32.totalorder %s27, 1
    %p134 = por %p132, %p133
    %p135 = scmp.ne.s32.totalorder %s126, %s127
    %p136 = scmp.eq.s32.totalorder %s27, 0
    %p137 = por %p135, %p136
    %p138 = scmp.ne.s32.totalorder %s126, %s127
    %p139 = scmp.eq.s32.totalorder %s28, 1
    %p140 = por %p138, %p139
    %p142 = scmp.ne.s32.totalorder %s127, %s141
    %p143 = scmp.eq.s32.totalorder %s28, 0
    %p144 = por %p142, %p143
    %s146 = sadd.s32 %s145, 1
    %p149 = scmp.eq.s32.totalorder %s22, 1
    %p150 = scmp.ne.s32.totalorder %s145, %s147
    %p151 = scmp.eq.s32.totalorder %s22, 0
    %p152 = por %p150, %p151
    %p153 = scmp.ne.s32.totalorder %s145, %s147
    %p154 = scmp.eq.s32.totalorder %s27, 1
    %p155 = por %p153, %p154
    %p156 = scmp.ne.s32.totalorder %s147, %s148
    %p157 = scmp.eq.s32.totalorder %s27, 0
    %p158 = por %p156, %p157
    %p159 = scmp.ne.s32.totalorder %s147, %s148
    %p160 = scmp.eq.s32.totalorder %s28, 1
    %p161 = por %p159, %p160
    %p163 = scmp.ne.s32.totalorder %s148, %s162
    %p164 = scmp.eq.s32.totalorder %s28, 0
    %p165 = por %p163, %p164
    %s167 = sadd.s32 %s166, 1
    %p170 = scmp.eq.s32.totalorder %s22, 1
    %p171 = scmp.ne.s32.totalorder %s166, %s168
    %p172 = scmp.eq.s32.totalorder %s22, 0
    %p173 = por %p171, %p172
    %p174 = scmp.ne.s32.totalorder %s166, %s168
    %p175 = scmp.eq.s32.totalorder %s27, 1
    %p176 = por %p174, %p175
    %p177 = scmp.ne.s32.totalorder %s168, %s169
    %p178 = scmp.eq.s32.totalorder %s27, 0
    %p179 = por %p177, %p178
    %p180 = scmp.ne.s32.totalorder %s168, %s169
    %p181 = scmp.eq.s32.totalorder %s28, 1
    %p182 = por %p180, %p181
    %p184 = scmp.ne.s32.totalorder %s169, %s183
    %p185 = scmp.eq.s32.totalorder %s28, 0
    %p186 = por %p184, %p185
    %s188 = sadd.s32 %s187, 1
    %p191 = scmp.eq.s32.totalorder %s22, 1
    %p192 = scmp.ne.s32.totalorder %s187, %s189
    %p193 = scmp.eq.s32.totalorder %s22, 0
    %p194 = por %p192, %p193
    %p195 = scmp.ne.s32.totalorder %s187, %s189
    %p196 = scmp.eq.s32.totalorder %s27, 1
    %p197 = por %p195, %p196
    %p198 = scmp.ne.s32.totalorder %s189, %s190
    %p199 = scmp.eq.s32.totalorder %s27, 0
    %p200 = por %p198, %p199
    %p201 = scmp.ne.s32.totalorder %s189, %s190
    %p202 = scmp.eq.s32.totalorder %s28, 1
    %p203 = por %p201, %p202
    %p205 = scmp.ne.s32.totalorder %s190, %s204
    %p206 = scmp.eq.s32.totalorder %s28, 0
    %p207 = por %p205, %p206
    %s209 = sadd.s32 %s208, 1
    %p212 = scmp.eq.s32.totalorder %s22, 1
    %p213 = scmp.ne.s32.totalorder %s208, %s210
    %p214 = scmp.eq.s32.totalorder %s22, 0
    %p215 = por %p213, %p214
    %p216 = scmp.ne.s32.totalorder %s208, %s210
    %p217 = scmp.eq.s32.totalorder %s27, 1
    %p218 = por %p216, %p217
    %p219 = scmp.ne.s32.totalorder %s210, %s211
    %p220 = scmp.eq.s32.totalorder %s27, 0
    %p221 = por %p219, %p220
    %p222 = scmp.ne.s32.totalorder %s210, %s211
    %p223 = scmp.eq.s32.totalorder %s28, 1
    %p224 = por %p222, %p223
    %p226 = scmp.ne.s32.totalorder %s211, %s225
    %p227 = scmp.eq.s32.totalorder %s28, 0
    %p228 = por %p226, %p227
    %s230 = sadd.s32 %s229, 1
    %p233 = scmp.eq.s32.totalorder %s22, 1
    %p234 = scmp.ne.s32.totalorder %s229, %s231
    %p235 = scmp.eq.s32.totalorder %s22, 0
    %p236 = por %p234, %p235
    %p237 = scmp.ne.s32.totalorder %s229, %s231
    %p238 = scmp.eq.s32.totalorder %s27, 1
    %p239 = por %p237, %p238
    %p240 = scmp.ne.s32.totalorder %s231, %s232
    %p241 = scmp.eq.s32.totalorder %s27, 0
    %p242 = por %p240, %p241
    %p243 = scmp.ne.s32.totalorder %s231, %s232
    %p244 = scmp.eq.s32.totalorder %s28, 1
    %p245 = por %p243, %p244
    %p247 = scmp.ne.s32.totalorder %s232, %s246
    %p248 = scmp.eq.s32.totalorder %s28, 0
    %p249 = por %p247, %p248
    %s251 = sadd.s32 %s250, 1
    %p254 = scmp.eq.s32.totalorder %s22, 1
    %p255 = scmp.ne.s32.totalorder %s250, %s252
    %p256 = scmp.eq.s32.totalorder %s22, 0
    %p257 = por %p255, %p256
    %p258 = scmp.ne.s32.totalorder %s250, %s252
    %p259 = scmp.eq.s32.totalorder %s27, 1
    %p260 = por %p258, %p259
    %p261 = scmp.ne.s32.totalorder %s252, %s253
    %p262 = scmp.eq.s32.totalorder %s27, 0
    %p263 = por %p261, %p262
    %p264 = scmp.ne.s32.totalorder %s252, %s253
    %p265 = scmp.eq.s32.totalorder %s28, 1
    %p266 = por %p264, %p265
    %p268 = scmp.ne.s32.totalorder %s253, %s267
    %p269 = scmp.eq.s32.totalorder %s28, 0
    %p270 = por %p268, %p269
    %s272 = sadd.s32 %s271, 1
    %p275 = scmp.eq.s32.totalorder %s22, 1
    %p276 = scmp.ne.s32.totalorder %s271, %s273
    %p277 = scmp.eq.s32.totalorder %s22, 0
    %p278 = por %p276, %p277
    %p279 = scmp.ne.s32.totalorder %s271, %s273
    %p280 = scmp.eq.s32.totalorder %s27, 1
    %p281 = por %p279, %p280
    %p282 = scmp.ne.s32.totalorder %s273, %s274
    %p283 = scmp.eq.s32.totalorder %s27, 0
    %p284 = por %p282, %p283
    %p285 = scmp.ne.s32.totalorder %s273, %s274
    %p286 = scmp.eq.s32.totalorder %s28, 1
    %p287 = por %p285, %p286
    %p289 = scmp.ne.s32.totalorder %s274, %s288
    %p290 = scmp.eq.s32.totalorder %s28, 0
    %p291 = por %p289, %p290
    %s292 = ssub.s32 %s22, %s29
    %p293 = scmp.eq.s32.totalorder %s292, 0
    %s295 = sadd.s32 %s294, 1
    %s296 = scalar_select %p293, %s294, %s295
    %p299 = pneg %p293
    %p300 = scmp.eq.s32.totalorder %s22, 1
    %p301 = por %p299, %p300
    %p302 = scmp.ne.s32.totalorder %s294, %s297
    %p303 = scmp.eq.s32.totalorder %s22, 0
    %p304 = por %p302, %p303
    %p305 = scmp.ne.s32.totalorder %s294, %s297
    %p306 = scmp.eq.s32.totalorder %s27, 1
    %p307 = por %p305, %p306
    %p308 = scmp.ne.s32.totalorder %s297, %s298
    %p309 = scmp.eq.s32.totalorder %s27, 0
    %p310 = por %p308, %p309
    %p311 = scmp.ne.s32.totalorder %s297, %s298
    %p312 = scmp.eq.s32.totalorder %s28, 1
    %p313 = por %p311, %p312
    %p315 = scmp.ne.s32.totalorder %s298, %s314
    %p316 = scmp.eq.s32.totalorder %s28, 0
    %p317 = por %p315, %p316
    %s318 = ssub.s32 %s22, %s29
    %p319 = scmp.eq.s32.totalorder %s318, 0
    %s321 = sadd.s32 %s320, 1
    %s322 = scalar_select %p319, %s320, %s321
    %p325 = pneg %p319
    %p326 = scmp.eq.s32.totalorder %s22, 1
    %p327 = por %p325, %p326
    %p328 = scmp.ne.s32.totalorder %s320, %s323
    %p329 = scmp.eq.s32.totalorder %s22, 0
    %p330 = por %p328, %p329
    %p331 = scmp.ne.s32.totalorder %s320, %s323
    %p332 = scmp.eq.s32.totalorder %s27, 1
    %p333 = por %p331, %p332
    %p334 = scmp.ne.s32.totalorder %s323, %s324
    %p335 = scmp.eq.s32.totalorder %s27, 0
    %p336 = por %p334, %p335
    %p337 = scmp.ne.s32.totalorder %s323, %s324
    %p338 = scmp.eq.s32.totalorder %s28, 1
    %p339 = por %p337, %p338
    %p341 = scmp.ne.s32.totalorder %s324, %s340
    %p342 = scmp.eq.s32.totalorder %s28, 0
    %p343 = por %p341, %p342
    %p344 = scmp.le.s32.totalorder 1, %s22
    %p345 = scmp.lt.s32.totalorder %s22, 3
    %p346 = pnand %p344, %p345
    %p347 = pneg %p346
    // Predicated region
    $region9: #{basemodel_forward.1} parent=5 // pred_check
      _
    $region10: #{basemodel_forward.1} parent=5 // pred_check_branch
      %349 = sbr.rel (%p346) target = $region12
    $region11: #{basemodel_forward.1} parent=5 // pred_region
      %s350 = ssub.s32 %s22, 1
      // Predicated region
      $region13: #{basemodel_forward.1} parent=11 // pred_check
        %p351 = pneg %p95
      $region14: #{basemodel_forward.1} parent=11 // pred_check_branch
        %353 = sbr.rel (%p351) target = $region16
      $region15: #{basemodel_forward.1} parent=11 // pred_region
        _
      $region16: #{basemodel_forward.1} parent=11 // pred_fallthru
        _
      // Predicated region
      $region17: #{basemodel_forward.1} parent=11 // pred_check
        %p354 = pneg %p116
      $region18: #{basemodel_forward.1} parent=11 // pred_check_branch
        %356 = sbr.rel (%p354) target = $region20
      $region19: #{basemodel_forward.1} parent=11 // pred_region
        _
      $region20: #{basemodel_forward.1} parent=11 // pred_fallthru
        _
      // Predicated region
      $region21: #{basemodel_forward.1} parent=11 // pred_check
        %p357 = pneg %p137
      $region22: #{basemodel_forward.1} parent=11 // pred_check_branch
        %359 = sbr.rel (%p357) target = $region24
      $region23: #{basemodel_forward.1} parent=11 // pred_region
        _
      $region24: #{basemodel_forward.1} parent=11 // pred_fallthru
        _
      // Predicated region
      $region25: #{basemodel_forward.1} parent=11 // pred_check
        %p360 = pneg %p158
      $region26: #{basemodel_forward.1} parent=11 // pred_check_branch
        %362 = sbr.rel (%p360) target = $region28
      $region27: #{basemodel_forward.1} parent=11 // pred_region
        _
      $region28: #{basemodel_forward.1} parent=11 // pred_fallthru
        _
      // Predicated region
      $region29: #{basemodel_forward.1} parent=11 // pred_check
        %p363 = pneg %p179
      $region30: #{basemodel_forward.1} parent=11 // pred_check_branch
        %365 = sbr.rel (%p363) target = $region32
      $region31: #{basemodel_forward.1} parent=11 // pred_region
        _
      $region32: #{basemodel_forward.1} parent=11 // pred_fallthru
        _
      // Predicated region
      $region33: #{basemodel_forward.1} parent=11 // pred_check
        %p366 = pneg %p200
      $region34: #{basemodel_forward.1} parent=11 // pred_check_branch
        %368 = sbr.rel (%p366) target = $region36
      $region35: #{basemodel_forward.1} parent=11 // pred_region
        _
      $region36: #{basemodel_forward.1} parent=11 // pred_fallthru
        _
      // Predicated region
      $region37: #{basemodel_forward.1} parent=11 // pred_check
        %p369 = pneg %p221
      $region38: #{basemodel_forward.1} parent=11 // pred_check_branch
        %371 = sbr.rel (%p369) target = $region40
      $region39: #{basemodel_forward.1} parent=11 // pred_region
        _
      $region40: #{basemodel_forward.1} parent=11 // pred_fallthru
        _
      // Predicated region
      $region41: #{basemodel_forward.1} parent=11 // pred_check
        %p372 = pneg %p242
      $region42: #{basemodel_forward.1} parent=11 // pred_check_branch
        %374 = sbr.rel (%p372) target = $region44
      $region43: #{basemodel_forward.1} parent=11 // pred_region
        _
      $region44: #{basemodel_forward.1} parent=11 // pred_fallthru
        _
      // Predicated region
      $region45: #{basemodel_forward.1} parent=11 // pred_check
        %p375 = pneg %p263
      $region46: #{basemodel_forward.1} parent=11 // pred_check_branch
        %377 = sbr.rel (%p375) target = $region48
      $region47: #{basemodel_forward.1} parent=11 // pred_region
        _
      $region48: #{basemodel_forward.1} parent=11 // pred_fallthru
        _
      // Predicated region
      $region49: #{basemodel_forward.1} parent=11 // pred_check
        %p378 = pneg %p284
      $region50: #{basemodel_forward.1} parent=11 // pred_check_branch
        %380 = sbr.rel (%p378) target = $region52
      $region51: #{basemodel_forward.1} parent=11 // pred_region
        _
      $region52: #{basemodel_forward.1} parent=11 // pred_fallthru
        _
    $region12: #{basemodel_forward.1} parent=5 // pred_fallthru
      _
    %p381 = scmp.lt.s32.totalorder %s22, 2
    // Predicated region
    $region53: #{basemodel_forward.1} parent=5 // pred_check
      %p382 = pneg %p381
    $region54: #{basemodel_forward.1} parent=5 // pred_check_branch
      %384 = sbr.rel (%p382) target = $region56
    $region55: #{basemodel_forward.1} parent=5 // pred_region
      // Predicated region
      $region57: #{basemodel_forward.1} parent=55 // pred_check
        %p385 = pneg %p42
      $region58: #{basemodel_forward.1} parent=55 // pred_check_branch
        %387 = sbr.rel (%p385) target = $region60
      $region59: #{basemodel_forward.1} parent=55 // pred_region
        %s388 = smul.u32 16, %s22
        %p389 = scmp.lt.s32.totalorder %s388, 31
        %s390 = scalar_select %p389, %s388, 31
        %s391 = smul.addr %s390, 8
        %s392 = scalar_lea.vmem %s0, %s391
        %s393 = smul.u32 16, %s22
      $region60: #{basemodel_forward.1} parent=55 // pred_fallthru
        _
      // Predicated region
      $region61: #{basemodel_forward.1} parent=55 // pred_check
        %p394 = pneg %p68
      $region62: #{basemodel_forward.1} parent=55 // pred_check_branch
        %396 = sbr.rel (%p394) target = $region64
      $region63: #{basemodel_forward.1} parent=55 // pred_region
        %s397 = smul.u32 16, %s22
        %p398 = scmp.lt.s32.totalorder %s397, 31
        %s399 = scalar_select %p398, %s397, 31
        %s400 = smul.addr %s399, 8
        %s401 = scalar_lea.vmem %s1, %s400
        %s402 = smul.u32 16, %s22
      $region64: #{basemodel_forward.1} parent=55 // pred_fallthru
        _
    $region56: #{basemodel_forward.1} parent=5 // pred_fallthru
      _
    %p403 = scmp.le.s32.totalorder 1, %s22
    %p404 = scmp.lt.s32.totalorder %s22, 3
    %p405 = pnand %p403, %p404
    %p406 = pneg %p405
    // Predicated region
    $region65: #{basemodel_forward.1} parent=5 // pred_check
      _
    $region66: #{basemodel_forward.1} parent=5 // pred_check_branch
      %408 = sbr.rel (%p405) target = $region68
    $region67: #{basemodel_forward.1} parent=5 // pred_region
      %s409 = ssub.s32 %s22, 1
      %s410 = smul.u32 16, %s27
      %p411 = scmp.lt.s32.totalorder %s410, 31
      %s412 = scalar_select %p411, %s410, 31
      %s413 = smul.addr %s412, 8
      %s414 = scalar_lea.vmem %s0, %s413
      %p415 = pneg %p48
      %p416 = pneg %p45
      %s417 = smul.u32 16, %s27
      %p418 = scmp.lt.s32.totalorder %s417, 31
      %s419 = scalar_select %p418, %s417, 31
      %s420 = smul.addr %s419, 8
      %s421 = scalar_lea.vmem %s1, %s420
      %p422 = pneg %p74
      %p423 = pneg %p71
      %p424 = pneg %p95
      %p425 = pneg %p92
      %p426 = pneg %p116
      %p427 = pneg %p113
      %p428 = pneg %p137
      %p429 = pneg %p134
      %p430 = pneg %p158
      %p431 = pneg %p155
      %p432 = pneg %p179
      %p433 = pneg %p176
      %p434 = pneg %p200
      %p435 = pneg %p197
      %p436 = pneg %p221
      %p437 = pneg %p218
      %p438 = pneg %p242
      %p439 = pneg %p239
      %p440 = pneg %p263
      %p441 = pneg %p260
      %p442 = pneg %p284
      %p443 = pneg %p281
      %p444 = pneg %p310
      %p445 = pneg %p307
      %s446 = smul.u32 16, %s27
      %p447 = scmp.lt.s32.totalorder %s446, 31
      %s448 = scalar_select %p447, %s446, 31
      %s449 = smul.addr %s448, 2
      %s450 = smul.addr %s449, 8
      %s451 = scalar_lea.vmem %s12, %s450
      %p452 = pneg %p336
      %p453 = pneg %p333
      %s454 = smul.u32 16, %s27
      %p455 = scmp.lt.s32.totalorder %s454, 31
      %s456 = scalar_select %p455, %s454, 31
      %s457 = smul.addr %s456, 8
      %s458 = scalar_lea.vmem %s13, %s457
      %s459 = smul.u32 16, %s27
      %p460 = scmp.lt.s32.totalorder %s459, 31
      %s461 = scalar_select %p460, %s459, 31
      %s462 = smul.addr %s461, 8
      %s463 = scalar_lea.vmem %s0, %s462
      %s464 = smul.u32 16, %s27
      %s465 = smul.u32 16, %s27
      %p466 = scmp.lt.s32.totalorder %s465, 31
      %s467 = scalar_select %p466, %s465, 31
      %s468 = smul.addr %s467, 8
      %s469 = scalar_lea.vmem %s1, %s468
      %s470 = smul.u32 16, %s27
      %s471 = smul.u32 16, %s27
      %p472 = scmp.lt.s32.totalorder %s471, 31
      %s473 = scalar_select %p472, %s471, 31
      %s474 = smul.addr %s473, 2
      %s475 = smul.addr %s474, 8
      %s476 = scalar_lea.vmem %s12, %s475
      %s477 = smul.u32 16, %s27
      %s478 = smul.u32 16, %s27
      %p479 = scmp.lt.s32.totalorder %s478, 31
      %s480 = scalar_select %p479, %s478, 31
      %s481 = smul.addr %s480, 8
      %s482 = scalar_lea.vmem %s13, %s481
      %s483 = smul.u32 16, %s27
      %v485 = vld [vmem:[%s463] sm:$0xff]
      %v486 = vld [vmem:[%s463 + $0x8] sm:$0xff]
      %v487 = vld [vmem:[%s463 + $0x10] sm:$0xff]
      %v488 = vld [vmem:[%s463 + $0x18] sm:$0xff]
      %v489 = vld [vmem:[%s463 + $0x20] sm:$0xff]
      %v490 = vld [vmem:[%s463 + $0x28] sm:$0xff]
      %v491 = vld [vmem:[%s463 + $0x30] sm:$0xff]
      %v492 = vld [vmem:[%s463 + $0x38] sm:$0xff]
      %v493 = vld [vmem:[%s463 + $0x40] sm:$0xff]
      %v494 = vld [vmem:[%s463 + $0x48] sm:$0xff]
      %v495 = vld [vmem:[%s463 + $0x50] sm:$0xff]
      %v496 = vld [vmem:[%s463 + $0x58] sm:$0xff]
      %v497 = vld [vmem:[%s463 + $0x60] sm:$0xff]
      %v498 = vld [vmem:[%s463 + $0x68] sm:$0xff]
      %v499 = vld [vmem:[%s463 + $0x70] sm:$0xff]
      %v500 = vld [vmem:[%s463 + $0x78] sm:$0xff]
      %v501 = vld [vmem:[%s469] sm:$0xff]
      %v502 = vld [vmem:[%s469 + $0x8] sm:$0xff]
      %v503 = vld [vmem:[%s469 + $0x10] sm:$0xff]
      %v504 = vld [vmem:[%s469 + $0x18] sm:$0xff]
      %v505 = vld [vmem:[%s469 + $0x20] sm:$0xff]
      %v506 = vld [vmem:[%s469 + $0x28] sm:$0xff]
      %v507 = vld [vmem:[%s469 + $0x30] sm:$0xff]
      %v508 = vld [vmem:[%s469 + $0x38] sm:$0xff]
      %v509 = vld [vmem:[%s469 + $0x40] sm:$0xff]
      %v510 = vld [vmem:[%s469 + $0x48] sm:$0xff]
      %v511 = vld [vmem:[%s469 + $0x50] sm:$0xff]
      %v512 = vld [vmem:[%s469 + $0x58] sm:$0xff]
      %v513 = vld [vmem:[%s469 + $0x60] sm:$0xff]
      %v514 = vld [vmem:[%s469 + $0x68] sm:$0xff]
      %v515 = vld [vmem:[%s469 + $0x70] sm:$0xff]
      %v516 = vld [vmem:[%s469 + $0x78] sm:$0xff]
      %v517 = vlaneseq
      %v518 = vand.u32 %v517, 127
      %v519 = vadd.s32 %v518, 128
      %520 = vset.pattern.permute.xlu0 0
      %521 = vperm.xlu0 %520, %v485
      %v522 = vpop.permute.xlu0 %521
      %523 = vset.pattern.permute.xlu0 0
      %524 = vperm.xlu0 %523, %v486
      %v525 = vpop.permute.xlu0 %524
      %526 = vset.pattern.permute.xlu0 0
      %527 = vperm.xlu0 %526, %v487
      %v528 = vpop.permute.xlu0 %527
      %529 = vset.pattern.permute.xlu0 0
      %530 = vperm.xlu0 %529, %v488
      %v531 = vpop.permute.xlu0 %530
      %532 = vset.pattern.permute.xlu0 0
      %533 = vperm.xlu0 %532, %v489
      %v534 = vpop.permute.xlu0 %533
      %535 = vset.pattern.permute.xlu0 0
      %536 = vperm.xlu0 %535, %v490
      %v537 = vpop.permute.xlu0 %536
      %538 = vset.pattern.permute.xlu0 0
      %539 = vperm.xlu0 %538, %v491
      %v540 = vpop.permute.xlu0 %539
      %541 = vset.pattern.permute.xlu0 0
      %542 = vperm.xlu0 %541, %v492
      %v543 = vpop.permute.xlu0 %542
      %544 = vset.pattern.permute.xlu0 0
      %545 = vperm.xlu0 %544, %v493
      %v546 = vpop.permute.xlu0 %545
      %547 = vset.pattern.permute.xlu0 0
      %548 = vperm.xlu0 %547, %v494
      %v549 = vpop.permute.xlu0 %548
      %550 = vset.pattern.permute.xlu0 0
      %551 = vperm.xlu0 %550, %v495
      %v552 = vpop.permute.xlu0 %551
      %553 = vset.pattern.permute.xlu0 0
      %554 = vperm.xlu0 %553, %v496
      %v555 = vpop.permute.xlu0 %554
      %556 = vset.pattern.permute.xlu0 0
      %557 = vperm.xlu0 %556, %v497
      %v558 = vpop.permute.xlu0 %557
      %559 = vset.pattern.permute.xlu0 0
      %560 = vperm.xlu0 %559, %v498
      %v561 = vpop.permute.xlu0 %560
      %562 = vset.pattern.permute.xlu0 0
      %563 = vperm.xlu0 %562, %v499
      %v564 = vpop.permute.xlu0 %563
      %565 = vset.pattern.permute.xlu0 0
      %566 = vperm.xlu0 %565, %v500
      %v567 = vpop.permute.xlu0 %566
      %vm568 = vcmp.eq.s32.totalorder %v518, %v522
      %vm569 = vcmp.eq.s32.totalorder %v519, %v522
      %vm570 = vcmp.eq.s32.totalorder %v518, %v525
      %vm571 = vcmp.eq.s32.totalorder %v519, %v525
      %vm572 = vcmp.eq.s32.totalorder %v518, %v528
      %vm573 = vcmp.eq.s32.totalorder %v519, %v528
      %vm574 = vcmp.eq.s32.totalorder %v518, %v531
      %vm575 = vcmp.eq.s32.totalorder %v519, %v531
      %vm576 = vcmp.eq.s32.totalorder %v518, %v534
      %vm577 = vcmp.eq.s32.totalorder %v519, %v534
      %vm578 = vcmp.eq.s32.totalorder %v518, %v537
      %vm579 = vcmp.eq.s32.totalorder %v519, %v537
      %vm580 = vcmp.eq.s32.totalorder %v518, %v540
      %vm581 = vcmp.eq.s32.totalorder %v519, %v540
      %vm582 = vcmp.eq.s32.totalorder %v518, %v543
      %vm583 = vcmp.eq.s32.totalorder %v519, %v543
      %vm584 = vcmp.eq.s32.totalorder %v518, %v546
      %vm585 = vcmp.eq.s32.totalorder %v519, %v546
      %vm586 = vcmp.eq.s32.totalorder %v518, %v549
      %vm587 = vcmp.eq.s32.totalorder %v519, %v549
      %vm588 = vcmp.eq.s32.totalorder %v518, %v552
      %vm589 = vcmp.eq.s32.totalorder %v519, %v552
      %vm590 = vcmp.eq.s32.totalorder %v518, %v555
      %vm591 = vcmp.eq.s32.totalorder %v519, %v555
      %vm592 = vcmp.eq.s32.totalorder %v518, %v558
      %vm593 = vcmp.eq.s32.totalorder %v519, %v558
      %vm594 = vcmp.eq.s32.totalorder %v518, %v561
      %vm595 = vcmp.eq.s32.totalorder %v519, %v561
      %vm596 = vcmp.eq.s32.totalorder %v518, %v564
      %vm597 = vcmp.eq.s32.totalorder %v519, %v564
      %vm598 = vcmp.eq.s32.totalorder %v518, %v567
      %vm599 = vcmp.eq.s32.totalorder %v519, %v567
      %v600 = vsel %vm568, 1.0, 0.0
      %v601 = vsel %vm569, 1.0, 0.0
      %v602 = vsel %vm570, 1.0, 0.0
      %v603 = vsel %vm571, 1.0, 0.0
      %v604 = vsel %vm572, 1.0, 0.0
      %v605 = vsel %vm573, 1.0, 0.0
      %v606 = vsel %vm574, 1.0, 0.0
      %v607 = vsel %vm575, 1.0, 0.0
      %v608 = vsel %vm576, 1.0, 0.0
      %v609 = vsel %vm577, 1.0, 0.0
      %v610 = vsel %vm578, 1.0, 0.0
      %v611 = vsel %vm579, 1.0, 0.0
      %v612 = vsel %vm580, 1.0, 0.0
      %v613 = vsel %vm581, 1.0, 0.0
      %v614 = vsel %vm582, 1.0, 0.0
      %v615 = vsel %vm583, 1.0, 0.0
      %v616 = vsel %vm584, 1.0, 0.0
      %v617 = vsel %vm585, 1.0, 0.0
      %v618 = vsel %vm586, 1.0, 0.0
      %v619 = vsel %vm587, 1.0, 0.0
      %v620 = vsel %vm588, 1.0, 0.0
      %v621 = vsel %vm589, 1.0, 0.0
      %v622 = vsel %vm590, 1.0, 0.0
      %v623 = vsel %vm591, 1.0, 0.0
      %v624 = vsel %vm592, 1.0, 0.0
      %v625 = vsel %vm593, 1.0, 0.0
      %v626 = vsel %vm594, 1.0, 0.0
      %v627 = vsel %vm595, 1.0, 0.0
      %v628 = vsel %vm596, 1.0, 0.0
      %v629 = vsel %vm597, 1.0, 0.0
      %v630 = vsel %vm598, 1.0, 0.0
      %v631 = vsel %vm599, 1.0, 0.0
      %v632 = vpack.c.bf16 %v602, %v600
      %v633 = vpack.c.bf16 %v603, %v601
      %v634 = vpack.c.bf16 %v606, %v604
      %v635 = vpack.c.bf16 %v607, %v605
      %v636 = vpack.c.bf16 %v610, %v608
      %v637 = vpack.c.bf16 %v611, %v609
      %v638 = vpack.c.bf16 %v614, %v612
      %v639 = vpack.c.bf16 %v615, %v613
      %v640 = vpack.c.bf16 %v618, %v616
      %v641 = vpack.c.bf16 %v619, %v617
      %v642 = vpack.c.bf16 %v622, %v620
      %v643 = vpack.c.bf16 %v623, %v621
      %v644 = vpack.c.bf16 %v626, %v624
      %v645 = vpack.c.bf16 %v627, %v625
      %v646 = vpack.c.bf16 %v630, %v628
      %v647 = vpack.c.bf16 %v631, %v629
      %v648 = vadd.s32 %v518, 256
      %v649 = vadd.s32 %v518, 384
      %650 = vset.pattern.permute.xlu0 0
      %651 = vperm.xlu0 %650, %v501
      %v652 = vpop.permute.xlu0 %651
      %653 = vset.pattern.permute.xlu0 0
      %654 = vperm.xlu0 %653, %v502
      %v655 = vpop.permute.xlu0 %654
      %656 = vset.pattern.permute.xlu0 0
      %657 = vperm.xlu0 %656, %v503
      %v658 = vpop.permute.xlu0 %657
      %659 = vset.pattern.permute.xlu0 0
      %660 = vperm.xlu0 %659, %v504
      %v661 = vpop.permute.xlu0 %660
      %662 = vset.pattern.permute.xlu0 0
      %663 = vperm.xlu0 %662, %v505
      %v664 = vpop.permute.xlu0 %663
      %665 = vset.pattern.permute.xlu0 0
      %666 = vperm.xlu0 %665, %v506
      %v667 = vpop.permute.xlu0 %666
      %668 = vset.pattern.permute.xlu0 0
      %669 = vperm.xlu0 %668, %v507
      %v670 = vpop.permute.xlu0 %669
      %671 = vset.pattern.permute.xlu0 0
      %672 = vperm.xlu0 %671, %v508
      %v673 = vpop.permute.xlu0 %672
      %674 = vset.pattern.permute.xlu0 0
      %675 = vperm.xlu0 %674, %v509
      %v676 = vpop.permute.xlu0 %675
      %677 = vset.pattern.permute.xlu0 0
      %678 = vperm.xlu0 %677, %v510
      %v679 = vpop.permute.xlu0 %678
      %680 = vset.pattern.permute.xlu0 0
      %681 = vperm.xlu0 %680, %v511
      %v682 = vpop.permute.xlu0 %681
      %683 = vset.pattern.permute.xlu0 0
      %684 = vperm.xlu0 %683, %v512
      %v685 = vpop.permute.xlu0 %684
      %686 = vset.pattern.permute.xlu0 0
      %687 = vperm.xlu0 %686, %v513
      %v688 = vpop.permute.xlu0 %687
      %689 = vset.pattern.permute.xlu0 0
      %690 = vperm.xlu0 %689, %v514
      %v691 = vpop.permute.xlu0 %690
      %692 = vset.pattern.permute.xlu0 0
      %693 = vperm.xlu0 %692, %v515
      %v694 = vpop.permute.xlu0 %693
      %695 = vset.pattern.permute.xlu0 0
      %696 = vperm.xlu0 %695, %v516
      %v697 = vpop.permute.xlu0 %696
      %vm698 = vcmp.eq.s32.totalorder %v518, %v652
      %vm699 = vcmp.eq.s32.totalorder %v519, %v652
      %vm700 = vcmp.eq.s32.totalorder %v648, %v652
      %vm701 = vcmp.eq.s32.totalorder %v649, %v652
      %vm702 = vcmp.eq.s32.totalorder %v518, %v655
      %vm703 = vcmp.eq.s32.totalorder %v519, %v655
      %vm704 = vcmp.eq.s32.totalorder %v648, %v655
      %vm705 = vcmp.eq.s32.totalorder %v649, %v655
      %vm706 = vcmp.eq.s32.totalorder %v518, %v658
      %vm707 = vcmp.eq.s32.totalorder %v519, %v658
      %vm708 = vcmp.eq.s32.totalorder %v648, %v658
      %vm709 = vcmp.eq.s32.totalorder %v649, %v658
      %vm710 = vcmp.eq.s32.totalorder %v518, %v661
      %vm711 = vcmp.eq.s32.totalorder %v519, %v661
      %vm712 = vcmp.eq.s32.totalorder %v648, %v661
      %vm713 = vcmp.eq.s32.totalorder %v649, %v661
      %vm714 = vcmp.eq.s32.totalorder %v518, %v664
      %vm715 = vcmp.eq.s32.totalorder %v519, %v664
      %vm716 = vcmp.eq.s32.totalorder %v648, %v664
      %vm717 = vcmp.eq.s32.totalorder %v649, %v664
      %vm718 = vcmp.eq.s32.totalorder %v518, %v667
      %vm719 = vcmp.eq.s32.totalorder %v519, %v667
      %vm720 = vcmp.eq.s32.totalorder %v648, %v667
      %vm721 = vcmp.eq.s32.totalorder %v649, %v667
      %vm722 = vcmp.eq.s32.totalorder %v518, %v670
      %vm723 = vcmp.eq.s32.totalorder %v519, %v670
      %vm724 = vcmp.eq.s32.totalorder %v648, %v670
      %vm725 = vcmp.eq.s32.totalorder %v649, %v670
      %vm726 = vcmp.eq.s32.totalorder %v518, %v673
      %vm727 = vcmp.eq.s32.totalorder %v519, %v673
      %vm728 = vcmp.eq.s32.totalorder %v648, %v673
      %vm729 = vcmp.eq.s32.totalorder %v649, %v673
      %vm730 = vcmp.eq.s32.totalorder %v518, %v676
      %vm731 = vcmp.eq.s32.totalorder %v519, %v676
      %vm732 = vcmp.eq.s32.totalorder %v648, %v676
      %vm733 = vcmp.eq.s32.totalorder %v649, %v676
      %vm734 = vcmp.eq.s32.totalorder %v518, %v679
      %vm735 = vcmp.eq.s32.totalorder %v519, %v679
      %vm736 = vcmp.eq.s32.totalorder %v648, %v679
      %vm737 = vcmp.eq.s32.totalorder %v649, %v679
      %vm738 = vcmp.eq.s32.totalorder %v518, %v682
      %vm739 = vcmp.eq.s32.totalorder %v519, %v682
      %vm740 = vcmp.eq.s32.totalorder %v648, %v682
      %vm741 = vcmp.eq.s32.totalorder %v649, %v682
      %vm742 = vcmp.eq.s32.totalorder %v518, %v685
      %vm743 = vcmp.eq.s32.totalorder %v519, %v685
      %vm744 = vcmp.eq.s32.totalorder %v648, %v685
      %vm745 = vcmp.eq.s32.totalorder %v649, %v685
      %vm746 = vcmp.eq.s32.totalorder %v518, %v688
      %vm747 = vcmp.eq.s32.totalorder %v519, %v688
      %vm748 = vcmp.eq.s32.totalorder %v648, %v688
      %vm749 = vcmp.eq.s32.totalorder %v649, %v688
      %vm750 = vcmp.eq.s32.totalorder %v518, %v691
      %vm751 = vcmp.eq.s32.totalorder %v519, %v691
      %vm752 = vcmp.eq.s32.totalorder %v648, %v691
      %vm753 = vcmp.eq.s32.totalorder %v649, %v691
      %vm754 = vcmp.eq.s32.totalorder %v518, %v694
      %vm755 = vcmp.eq.s32.totalorder %v519, %v694
      %vm756 = vcmp.eq.s32.totalorder %v648, %v694
      %vm757 = vcmp.eq.s32.totalorder %v649, %v694
      %vm758 = vcmp.eq.s32.totalorder %v518, %v697
      %vm759 = vcmp.eq.s32.totalorder %v519, %v697
      %vm760 = vcmp.eq.s32.totalorder %v648, %v697
      %vm761 = vcmp.eq.s32.totalorder %v649, %v697
      %v762 = vsel %vm698, 1.0, 0.0
      %v763 = vsel %vm699, 1.0, 0.0
      %v764 = vsel %vm700, 1.0, 0.0
      %v765 = vsel %vm701, 1.0, 0.0
      %v766 = vsel %vm702, 1.0, 0.0
      %v767 = vsel %vm703, 1.0, 0.0
      %v768 = vsel %vm704, 1.0, 0.0
      %v769 = vsel %vm705, 1.0, 0.0
      %v770 = vsel %vm706, 1.0, 0.0
      %v771 = vsel %vm707, 1.0, 0.0
      %v772 = vsel %vm708, 1.0, 0.0
      %v773 = vsel %vm709, 1.0, 0.0
      %v774 = vsel %vm710, 1.0, 0.0
      %v775 = vsel %vm711, 1.0, 0.0
      %v776 = vsel %vm712, 1.0, 0.0
      %v777 = vsel %vm713, 1.0, 0.0
      %v778 = vsel %vm714, 1.0, 0.0
      %v779 = vsel %vm715, 1.0, 0.0
      %v780 = vsel %vm716, 1.0, 0.0
      %v781 = vsel %vm717, 1.0, 0.0
      %v782 = vsel %vm718, 1.0, 0.0
      %v783 = vsel %vm719, 1.0, 0.0
      %v784 = vsel %vm720, 1.0, 0.0
      %v785 = vsel %vm721, 1.0, 0.0
      %v786 = vsel %vm722, 1.0, 0.0
      %v787 = vsel %vm723, 1.0, 0.0
      %v788 = vsel %vm724, 1.0, 0.0
      %v789 = vsel %vm725, 1.0, 0.0
      %v790 = vsel %vm726, 1.0, 0.0
      %v791 = vsel %vm727, 1.0, 0.0
      %v792 = vsel %vm728, 1.0, 0.0
      %v793 = vsel %vm729, 1.0, 0.0
      %v794 = vsel %vm730, 1.0, 0.0
      %v795 = vsel %vm731, 1.0, 0.0
      %v796 = vsel %vm732, 1.0, 0.0
      %v797 = vsel %vm733, 1.0, 0.0
      %v798 = vsel %vm734, 1.0, 0.0
      %v799 = vsel %vm735, 1.0, 0.0
      %v800 = vsel %vm736, 1.0, 0.0
      %v801 = vsel %vm737, 1.0, 0.0
      %v802 = vsel %vm738, 1.0, 0.0
      %v803 = vsel %vm739, 1.0, 0.0
      %v804 = vsel %vm740, 1.0, 0.0
      %v805 = vsel %vm741, 1.0, 0.0
      %v806 = vsel %vm742, 1.0, 0.0
      %v807 = vsel %vm743, 1.0, 0.0
      %v808 = vsel %vm744, 1.0, 0.0
      %v809 = vsel %vm745, 1.0, 0.0
      %v810 = vsel %vm746, 1.0, 0.0
      %v811 = vsel %vm747, 1.0, 0.0
      %v812 = vsel %vm748, 1.0, 0.0
      %v813 = vsel %vm749, 1.0, 0.0
      %v814 = vsel %vm750, 1.0, 0.0
      %v815 = vsel %vm751, 1.0, 0.0
      %v816 = vsel %vm752, 1.0, 0.0
      %v817 = vsel %vm753, 1.0, 0.0
      %v818 = vsel %vm754, 1.0, 0.0
      %v819 = vsel %vm755, 1.0, 0.0
      %v820 = vsel %vm756, 1.0, 0.0
      %v821 = vsel %vm757, 1.0, 0.0
      %v822 = vsel %vm758, 1.0, 0.0
      %v823 = vsel %vm759, 1.0, 0.0
      %v824 = vsel %vm760, 1.0, 0.0
      %v825 = vsel %vm761, 1.0, 0.0
      %v826 = vpack.c.bf16 %v766, %v762
      %v827 = vpack.c.bf16 %v767, %v763
      %v828 = vpack.c.bf16 %v768, %v764
      %v829 = vpack.c.bf16 %v769, %v765
      %v830 = vpack.c.bf16 %v774, %v770
      %v831 = vpack.c.bf16 %v775, %v771
      %v832 = vpack.c.bf16 %v776, %v772
      %v833 = vpack.c.bf16 %v777, %v773
      %v834 = vpack.c.bf16 %v782, %v778
      %v835 = vpack.c.bf16 %v783, %v779
      %v836 = vpack.c.bf16 %v784, %v780
      %v837 = vpack.c.bf16 %v785, %v781
      %v838 = vpack.c.bf16 %v790, %v786
      %v839 = vpack.c.bf16 %v791, %v787
      %v840 = vpack.c.bf16 %v792, %v788
      %v841 = vpack.c.bf16 %v793, %v789
      %v842 = vpack.c.bf16 %v798, %v794
      %v843 = vpack.c.bf16 %v799, %v795
      %v844 = vpack.c.bf16 %v800, %v796
      %v845 = vpack.c.bf16 %v801, %v797
      %v846 = vpack.c.bf16 %v806, %v802
      %v847 = vpack.c.bf16 %v807, %v803
      %v848 = vpack.c.bf16 %v808, %v804
      %v849 = vpack.c.bf16 %v809, %v805
      %v850 = vpack.c.bf16 %v814, %v810
      %v851 = vpack.c.bf16 %v815, %v811
      %v852 = vpack.c.bf16 %v816, %v812
      %v853 = vpack.c.bf16 %v817, %v813
      %v854 = vpack.c.bf16 %v822, %v818
      %v855 = vpack.c.bf16 %v823, %v819
      %v856 = vpack.c.bf16 %v824, %v820
      %v857 = vpack.c.bf16 %v825, %v821
      %v858 = vld [vmem:[%s2] sm:$0xf]
      %v859 = vld [vmem:[%s2 + $0x4] sm:$0xf]
      %v860 = vld [vmem:[%s2 + $0x8] sm:$0xf]
      %v861 = vld [vmem:[%s2 + $0xc] sm:$0xf]
      %v862 = vld [vmem:[%s2 + $0x10] sm:$0xf]
      %v863 = vld [vmem:[%s2 + $0x14] sm:$0xf]
      %v864 = vld [vmem:[%s2 + $0x18] sm:$0xf]
      %v865 = vld [vmem:[%s2 + $0x1c] sm:$0xf]
      %v866 = vld [vmem:[%s2 + $0x20] sm:$0xf]
      %v867 = vld [vmem:[%s2 + $0x24] sm:$0xf]
      %v868 = vld [vmem:[%s2 + $0x28] sm:$0xf]
      %v869 = vld [vmem:[%s2 + $0x2c] sm:$0xf]
      %v870 = vld [vmem:[%s2 + $0x30] sm:$0xf]
      %v871 = vld [vmem:[%s2 + $0x34] sm:$0xf]
      %v872 = vld [vmem:[%s2 + $0x38] sm:$0xf]
      %v873 = vld [vmem:[%s2 + $0x3c] sm:$0xf]
      %v874 = vld [vmem:[%s2 + $0x40] sm:$0xf]
      %v875 = vld [vmem:[%s2 + $0x44] sm:$0xf]
      %v876 = vld [vmem:[%s2 + $0x48] sm:$0xf]
      %v877 = vld [vmem:[%s2 + $0x4c] sm:$0xf]
      %v878 = vld [vmem:[%s2 + $0x50] sm:$0xf]
      %v879 = vld [vmem:[%s2 + $0x54] sm:$0xf]
      %v880 = vld [vmem:[%s2 + $0x58] sm:$0xf]
      %v881 = vld [vmem:[%s2 + $0x5c] sm:$0xf]
      %v882 = vld [vmem:[%s2 + $0x60] sm:$0xf]
      %v883 = vld [vmem:[%s2 + $0x64] sm:$0xf]
      %v884 = vld [vmem:[%s2 + $0x68] sm:$0xf]
      %v885 = vld [vmem:[%s2 + $0x6c] sm:$0xf]
      %v886 = vld [vmem:[%s2 + $0x70] sm:$0xf]
      %v887 = vld [vmem:[%s2 + $0x74] sm:$0xf]
      %v888 = vld [vmem:[%s2 + $0x78] sm:$0xf]
      %v889 = vld [vmem:[%s2 + $0x7c] sm:$0xf]
      %v922 = vunpack.c.l.b16 %v858
      %v923 = vunpack.c.l.b16 %v859
      %v924 = vunpack.c.l.b16 %v860
      %v925 = vunpack.c.l.b16 %v861
      %v926 = vunpack.c.l.b16 %v862
      %v927 = vunpack.c.l.b16 %v863
      %v928 = vunpack.c.l.b16 %v864
      %v929 = vunpack.c.l.b16 %v865
      %v930 = vunpack.c.l.b16 %v866
      %v931 = vunpack.c.l.b16 %v867
      %v932 = vunpack.c.l.b16 %v868
      %v933 = vunpack.c.l.b16 %v869
      %v934 = vunpack.c.l.b16 %v870
      %v935 = vunpack.c.l.b16 %v871
      %v936 = vunpack.c.l.b16 %v872
      %v937 = vunpack.c.l.b16 %v873
      %v938 = vunpack.c.l.b16 %v874
      %v939 = vunpack.c.l.b16 %v875
      %v940 = vunpack.c.l.b16 %v876
      %v941 = vunpack.c.l.b16 %v877
      %v942 = vunpack.c.l.b16 %v878
      %v943 = vunpack.c.l.b16 %v879
      %v944 = vunpack.c.l.b16 %v880
      %v945 = vunpack.c.l.b16 %v881
      %v946 = vunpack.c.l.b16 %v882
      %v947 = vunpack.c.l.b16 %v883
      %v948 = vunpack.c.l.b16 %v884
      %v949 = vunpack.c.l.b16 %v885
      %v950 = vunpack.c.l.b16 %v886
      %v951 = vunpack.c.l.b16 %v887
      %v952 = vunpack.c.l.b16 %v888
      %v953 = vunpack.c.l.b16 %v889
      %v954 = vpack.c.b16 %v923, %v922
      %v955 = vpack.c.b16 %v925, %v924
      %v956 = vpack.c.b16 %v927, %v926
      %v957 = vpack.c.b16 %v929, %v928
      %v958 = vpack.c.b16 %v931, %v930
      %v959 = vpack.c.b16 %v933, %v932
      %v960 = vpack.c.b16 %v935, %v934
      %v961 = vpack.c.b16 %v937, %v936
      %v962 = vpack.c.b16 %v939, %v938
      %v963 = vpack.c.b16 %v941, %v940
      %v964 = vpack.c.b16 %v943, %v942
      %v965 = vpack.c.b16 %v945, %v944
      %v966 = vpack.c.b16 %v947, %v946
      %v967 = vpack.c.b16 %v949, %v948
      %v968 = vpack.c.b16 %v951, %v950
      %v969 = vpack.c.b16 %v953, %v952
      %986 = vmatprep.subr.bf16.mxu0 0
      %987 = vmatpush1.bf16.msra.mxu0 %v961
      %988 = vmatprep.subr.bf16.mxu0 0
      %989 = vmatpush1.bf16.msra.mxu0 %v960
      %990 = vmatprep.subr.bf16.mxu0 0
      %991 = vmatpush1.bf16.msra.mxu0 %v959
      %992 = vmatprep.subr.bf16.mxu0 0
      %993 = vmatpush1.bf16.msra.mxu0 %v958
      %994 = vmatprep.subr.bf16.mxu0 0
      %995 = vmatpush1.bf16.msra.mxu0 %v957
      %996 = vmatprep.subr.bf16.mxu0 0
      %997 = vmatpush1.bf16.msra.mxu0 %v956
      %998 = vmatprep.subr.bf16.mxu0 0
      %999 = vmatpush1.bf16.msra.mxu0 %v955
      %1000 = vmatprep.subr.bf16.mxu0 0
      %1001 = vmatpush1.bf16.msra.mxu0 %v954
      %1002 = vmatprep.subr.bf16.mxu0 0
      %1003 = vmatpush2.bf16.msra.mxu0 %v969
      %1004 = vmatprep.subr.bf16.mxu0 0
      %1005 = vmatpush2.bf16.msra.mxu0 %v968
      %1006 = vmatprep.subr.bf16.mxu0 0
      %1007 = vmatpush2.bf16.msra.mxu0 %v967
      %1008 = vmatprep.subr.bf16.mxu0 0
      %1009 = vmatpush2.bf16.msra.mxu0 %v966
      %1010 = vmatprep.subr.bf16.mxu0 0
      %1011 = vmatpush2.bf16.msra.mxu0 %v965
      %1012 = vmatprep.subr.bf16.mxu0 0
      %1013 = vmatpush2.bf16.msra.mxu0 %v964
      %1014 = vmatprep.subr.bf16.mxu0 0
      %1015 = vmatpush2.bf16.msra.mxu0 %v963
      %1016 = vmatprep.subr.bf16.mxu0 0
      %1017 = vmatpush2.bf16.msra.mxu0 %v962
      %1018 = vmatprep.mubr.bf16.mxu0 %v633
      %1019 = vmatmul.mubr.bf16.gmra.mxu0 %v632
      %v1020 = vpop.f32.mrf.mxu0
      %v1021 = vadd.f32 0.0, %v1020
      %v1022 = vpop.f32.mrf.mxu0
      %v1023 = vpop.f32.mrf.mxu0
      %v1024 = vadd.f32 0.0, %v1023
      %v1025 = vpop.f32.mrf.mxu0
      %1026 = vmatprep.mubr.bf16.mxu0 %v635
      %1027 = vmatmul.mubr.bf16.gmra.mxu0 %v634
      %v1028 = vpop.f32.mrf.mxu0
      %v1029 = vadd.f32 0.0, %v1028
      %v1030 = vpop.f32.mrf.mxu0
      %v1031 = vpop.f32.mrf.mxu0
      %v1032 = vadd.f32 0.0, %v1031
      %v1033 = vpop.f32.mrf.mxu0
      %1034 = vmatprep.mubr.bf16.mxu0 %v637
      %1035 = vmatmul.mubr.bf16.gmra.mxu0 %v636
      %v1036 = vpop.f32.mrf.mxu0
      %v1037 = vadd.f32 0.0, %v1036
      %v1038 = vpop.f32.mrf.mxu0
      %v1039 = vpop.f32.mrf.mxu0
      %v1040 = vadd.f32 0.0, %v1039
      %v1041 = vpop.f32.mrf.mxu0
      %1042 = vmatprep.mubr.bf16.mxu0 %v639
      %1043 = vmatmul.mubr.bf16.gmra.mxu0 %v638
      %v1044 = vpop.f32.mrf.mxu0
      %v1045 = vadd.f32 0.0, %v1044
      %v1046 = vpop.f32.mrf.mxu0
      %v1047 = vpop.f32.mrf.mxu0
      %v1048 = vadd.f32 0.0, %v1047
      %v1049 = vpop.f32.mrf.mxu0
      %1050 = vmatprep.mubr.bf16.mxu0 %v641
      %1051 = vmatmul.mubr.bf16.gmra.mxu0 %v640
      %v1052 = vpop.f32.mrf.mxu0
      %v1053 = vadd.f32 0.0, %v1052
      %v1054 = vpop.f32.mrf.mxu0
      %v1055 = vpop.f32.mrf.mxu0
      %v1056 = vadd.f32 0.0, %v1055
      %v1057 = vpop.f32.mrf.mxu0
      %1058 = vmatprep.mubr.bf16.mxu0 %v643
      %1059 = vmatmul.mubr.bf16.gmra.mxu0 %v642
      %v1060 = vpop.f32.mrf.mxu0
      %v1061 = vadd.f32 0.0, %v1060
      %v1062 = vpop.f32.mrf.mxu0
      %v1063 = vpop.f32.mrf.mxu0
      %v1064 = vadd.f32 0.0, %v1063
      %v1065 = vpop.f32.mrf.mxu0
      %1066 = vmatprep.mubr.bf16.mxu0 %v645
      %1067 = vmatmul.mubr.bf16.gmra.mxu0 %v644
      %v1068 = vpop.f32.mrf.mxu0
      %v1069 = vadd.f32 0.0, %v1068
      %v1070 = vpop.f32.mrf.mxu0
      %v1071 = vpop.f32.mrf.mxu0
      %v1072 = vadd.f32 0.0, %v1071
      %v1073 = vpop.f32.mrf.mxu0
      %1074 = vmatprep.mubr.bf16.mxu0 %v647
      %1075 = vmatmul.mubr.bf16.gmra.mxu0 %v646
      %v1076 = vpop.f32.mrf.mxu0
      %v1077 = vadd.f32 0.0, %v1076
      %v1078 = vpop.f32.mrf.mxu0
      %v1079 = vpop.f32.mrf.mxu0
      %v1080 = vadd.f32 0.0, %v1079
      %v1081 = vpop.f32.mrf.mxu0
      %1082 = vdwg.mxu0
      %v1083 = vpack.c.bf16 %v1024, %v1021
      %v1084 = vpack.c.bf16 %v1032, %v1029
      %v1085 = vpack.c.bf16 %v1040, %v1037
      %v1086 = vpack.c.bf16 %v1048, %v1045
      %v1087 = vpack.c.bf16 %v1056, %v1053
      %v1088 = vpack.c.bf16 %v1064, %v1061
      %v1089 = vpack.c.bf16 %v1072, %v1069
      %v1090 = vpack.c.bf16 %v1080, %v1077
      %v1091 = vld [vmem:[%s3] sm:$0xf]
      %v1092 = vld [vmem:[%s3 + $0x4] sm:$0xf]
      %v1093 = vld [vmem:[%s3 + $0x8] sm:$0xf]
      %v1094 = vld [vmem:[%s3 + $0xc] sm:$0xf]
      %v1095 = vld [vmem:[%s3 + $0x10] sm:$0xf]
      %v1096 = vld [vmem:[%s3 + $0x14] sm:$0xf]
      %v1097 = vld [vmem:[%s3 + $0x18] sm:$0xf]
      %v1098 = vld [vmem:[%s3 + $0x1c] sm:$0xf]
      %v1099 = vld [vmem:[%s3 + $0x20] sm:$0xf]
      %v1100 = vld [vmem:[%s3 + $0x24] sm:$0xf]
      %v1101 = vld [vmem:[%s3 + $0x28] sm:$0xf]
      %v1102 = vld [vmem:[%s3 + $0x2c] sm:$0xf]
      %v1103 = vld [vmem:[%s3 + $0x30] sm:$0xf]
      %v1104 = vld [vmem:[%s3 + $0x34] sm:$0xf]
      %v1105 = vld [vmem:[%s3 + $0x38] sm:$0xf]
      %v1106 = vld [vmem:[%s3 + $0x3c] sm:$0xf]
      %v1107 = vld [vmem:[%s3 + $0x40] sm:$0xf]
      %v1108 = vld [vmem:[%s3 + $0x44] sm:$0xf]
      %v1109 = vld [vmem:[%s3 + $0x48] sm:$0xf]
      %v1110 = vld [vmem:[%s3 + $0x4c] sm:$0xf]
      %v1111 = vld [vmem:[%s3 + $0x50] sm:$0xf]
      %v1112 = vld [vmem:[%s3 + $0x54] sm:$0xf]
      %v1113 = vld [vmem:[%s3 + $0x58] sm:$0xf]
      %v1114 = vld [vmem:[%s3 + $0x5c] sm:$0xf]
      %v1115 = vld [vmem:[%s3 + $0x60] sm:$0xf]
      %v1116 = vld [vmem:[%s3 + $0x64] sm:$0xf]
      %v1117 = vld [vmem:[%s3 + $0x68] sm:$0xf]
      %v1118 = vld [vmem:[%s3 + $0x6c] sm:$0xf]
      %v1119 = vld [vmem:[%s3 + $0x70] sm:$0xf]
      %v1120 = vld [vmem:[%s3 + $0x74] sm:$0xf]
      %v1121 = vld [vmem:[%s3 + $0x78] sm:$0xf]
      %v1122 = vld [vmem:[%s3 + $0x7c] sm:$0xf]
      %v1123 = vld [vmem:[%s3 + $0x80] sm:$0xf]
      %v1124 = vld [vmem:[%s3 + $0x84] sm:$0xf]
      %v1125 = vld [vmem:[%s3 + $0x88] sm:$0xf]
      %v1126 = vld [vmem:[%s3 + $0x8c] sm:$0xf]
      %v1127 = vld [vmem:[%s3 + $0x90] sm:$0xf]
      %v1128 = vld [vmem:[%s3 + $0x94] sm:$0xf]
      %v1129 = vld [vmem:[%s3 + $0x98] sm:$0xf]
      %v1130 = vld [vmem:[%s3 + $0x9c] sm:$0xf]
      %v1131 = vld [vmem:[%s3 + $0xa0] sm:$0xf]
      %v1132 = vld [vmem:[%s3 + $0xa4] sm:$0xf]
      %v1133 = vld [vmem:[%s3 + $0xa8] sm:$0xf]
      %v1134 = vld [vmem:[%s3 + $0xac] sm:$0xf]
      %v1135 = vld [vmem:[%s3 + $0xb0] sm:$0xf]
      %v1136 = vld [vmem:[%s3 + $0xb4] sm:$0xf]
      %v1137 = vld [vmem:[%s3 + $0xb8] sm:$0xf]
      %v1138 = vld [vmem:[%s3 + $0xbc] sm:$0xf]
      %v1139 = vld [vmem:[%s3 + $0xc0] sm:$0xf]
      %v1140 = vld [vmem:[%s3 + $0xc4] sm:$0xf]
      %v1141 = vld [vmem:[%s3 + $0xc8] sm:$0xf]
      %v1142 = vld [vmem:[%s3 + $0xcc] sm:$0xf]
      %v1143 = vld [vmem:[%s3 + $0xd0] sm:$0xf]
      %v1144 = vld [vmem:[%s3 + $0xd4] sm:$0xf]
      %v1145 = vld [vmem:[%s3 + $0xd8] sm:$0xf]
      %v1146 = vld [vmem:[%s3 + $0xdc] sm:$0xf]
      %v1147 = vld [vmem:[%s3 + $0xe0] sm:$0xf]
      %v1148 = vld [vmem:[%s3 + $0xe4] sm:$0xf]
      %v1149 = vld [vmem:[%s3 + $0xe8] sm:$0xf]
      %v1150 = vld [vmem:[%s3 + $0xec] sm:$0xf]
      %v1151 = vld [vmem:[%s3 + $0xf0] sm:$0xf]
      %v1152 = vld [vmem:[%s3 + $0xf4] sm:$0xf]
      %v1153 = vld [vmem:[%s3 + $0xf8] sm:$0xf]
      %v1154 = vld [vmem:[%s3 + $0xfc] sm:$0xf]
      %v1219 = vunpack.c.l.b16 %v1091
      %v1220 = vunpack.c.l.b16 %v1092
      %v1221 = vunpack.c.l.b16 %v1093
      %v1222 = vunpack.c.l.b16 %v1094
      %v1223 = vunpack.c.l.b16 %v1095
      %v1224 = vunpack.c.l.b16 %v1096
      %v1225 = vunpack.c.l.b16 %v1097
      %v1226 = vunpack.c.l.b16 %v1098
      %v1227 = vunpack.c.l.b16 %v1099
      %v1228 = vunpack.c.l.b16 %v1100
      %v1229 = vunpack.c.l.b16 %v1101
      %v1230 = vunpack.c.l.b16 %v1102
      %v1231 = vunpack.c.l.b16 %v1103
      %v1232 = vunpack.c.l.b16 %v1104
      %v1233 = vunpack.c.l.b16 %v1105
      %v1234 = vunpack.c.l.b16 %v1106
      %v1235 = vunpack.c.l.b16 %v1107
      %v1236 = vunpack.c.l.b16 %v1108
      %v1237 = vunpack.c.l.b16 %v1109
      %v1238 = vunpack.c.l.b16 %v1110
      %v1239 = vunpack.c.l.b16 %v1111
      %v1240 = vunpack.c.l.b16 %v1112
      %v1241 = vunpack.c.l.b16 %v1113
      %v1242 = vunpack.c.l.b16 %v1114
      %v1243 = vunpack.c.l.b16 %v1115
      %v1244 = vunpack.c.l.b16 %v1116
      %v1245 = vunpack.c.l.b16 %v1117
      %v1246 = vunpack.c.l.b16 %v1118
      %v1247 = vunpack.c.l.b16 %v1119
      %v1248 = vunpack.c.l.b16 %v1120
      %v1249 = vunpack.c.l.b16 %v1121
      %v1250 = vunpack.c.l.b16 %v1122
      %v1251 = vunpack.c.l.b16 %v1123
      %v1252 = vunpack.c.l.b16 %v1124
      %v1253 = vunpack.c.l.b16 %v1125
      %v1254 = vunpack.c.l.b16 %v1126
      %v1255 = vunpack.c.l.b16 %v1127
      %v1256 = vunpack.c.l.b16 %v1128
      %v1257 = vunpack.c.l.b16 %v1129
      %v1258 = vunpack.c.l.b16 %v1130
      %v1259 = vunpack.c.l.b16 %v1131
      %v1260 = vunpack.c.l.b16 %v1132
      %v1261 = vunpack.c.l.b16 %v1133
      %v1262 = vunpack.c.l.b16 %v1134
      %v1263 = vunpack.c.l.b16 %v1135
      %v1264 = vunpack.c.l.b16 %v1136
      %v1265 = vunpack.c.l.b16 %v1137
      %v1266 = vunpack.c.l.b16 %v1138
      %v1267 = vunpack.c.l.b16 %v1139
      %v1268 = vunpack.c.l.b16 %v1140
      %v1269 = vunpack.c.l.b16 %v1141
      %v1270 = vunpack.c.l.b16 %v1142
      %v1271 = vunpack.c.l.b16 %v1143
      %v1272 = vunpack.c.l.b16 %v1144
      %v1273 = vunpack.c.l.b16 %v1145
      %v1274 = vunpack.c.l.b16 %v1146
      %v1275 = vunpack.c.l.b16 %v1147
      %v1276 = vunpack.c.l.b16 %v1148
      %v1277 = vunpack.c.l.b16 %v1149
      %v1278 = vunpack.c.l.b16 %v1150
      %v1279 = vunpack.c.l.b16 %v1151
      %v1280 = vunpack.c.l.b16 %v1152
      %v1281 = vunpack.c.l.b16 %v1153
      %v1282 = vunpack.c.l.b16 %v1154
      %v1283 = vpack.c.b16 %v1220, %v1219
      %v1284 = vpack.c.b16 %v1222, %v1221
      %v1285 = vpack.c.b16 %v1224, %v1223
      %v1286 = vpack.c.b16 %v1226, %v1225
      %v1287 = vpack.c.b16 %v1228, %v1227
      %v1288 = vpack.c.b16 %v1230, %v1229
      %v1289 = vpack.c.b16 %v1232, %v1231
      %v1290 = vpack.c.b16 %v1234, %v1233
      %v1291 = vpack.c.b16 %v1236, %v1235
      %v1292 = vpack.c.b16 %v1238, %v1237
      %v1293 = vpack.c.b16 %v1240, %v1239
      %v1294 = vpack.c.b16 %v1242, %v1241
      %v1295 = vpack.c.b16 %v1244, %v1243
      %v1296 = vpack.c.b16 %v1246, %v1245
      %v1297 = vpack.c.b16 %v1248, %v1247
      %v1298 = vpack.c.b16 %v1250, %v1249
      %v1299 = vpack.c.b16 %v1252, %v1251
      %v1300 = vpack.c.b16 %v1254, %v1253
      %v1301 = vpack.c.b16 %v1256, %v1255
      %v1302 = vpack.c.b16 %v1258, %v1257
      %v1303 = vpack.c.b16 %v1260, %v1259
      %v1304 = vpack.c.b16 %v1262, %v1261
      %v1305 = vpack.c.b16 %v1264, %v1263
      %v1306 = vpack.c.b16 %v1266, %v1265
      %v1307 = vpack.c.b16 %v1268, %v1267
      %v1308 = vpack.c.b16 %v1270, %v1269
      %v1309 = vpack.c.b16 %v1272, %v1271
      %v1310 = vpack.c.b16 %v1274, %v1273
      %v1311 = vpack.c.b16 %v1276, %v1275
      %v1312 = vpack.c.b16 %v1278, %v1277
      %v1313 = vpack.c.b16 %v1280, %v1279
      %v1314 = vpack.c.b16 %v1282, %v1281
      %1347 = vmatprep.subr.bf16.mxu0 0
      %1348 = vmatpush1.bf16.msra.mxu0 %v1290
      %1349 = vmatprep.subr.bf16.mxu0 0
      %1350 = vmatpush1.bf16.msra.mxu0 %v1289
      %1351 = vmatprep.subr.bf16.mxu0 0
      %1352 = vmatpush1.bf16.msra.mxu0 %v1288
      %1353 = vmatprep.subr.bf16.mxu0 0
      %1354 = vmatpush1.bf16.msra.mxu0 %v1287
      %1355 = vmatprep.subr.bf16.mxu0 0
      %1356 = vmatpush1.bf16.msra.mxu0 %v1286
      %1357 = vmatprep.subr.bf16.mxu0 0
      %1358 = vmatpush1.bf16.msra.mxu0 %v1285
      %1359 = vmatprep.subr.bf16.mxu0 0
      %1360 = vmatpush1.bf16.msra.mxu0 %v1284
      %1361 = vmatprep.subr.bf16.mxu0 0
      %1362 = vmatpush1.bf16.msra.mxu0 %v1283
      %1363 = vmatprep.subr.bf16.mxu0 0
      %1364 = vmatpush2.bf16.msra.mxu0 %v1298
      %1365 = vmatprep.subr.bf16.mxu0 0
      %1366 = vmatpush2.bf16.msra.mxu0 %v1297
      %1367 = vmatprep.subr.bf16.mxu0 0
      %1368 = vmatpush2.bf16.msra.mxu0 %v1296
      %1369 = vmatprep.subr.bf16.mxu0 0
      %1370 = vmatpush2.bf16.msra.mxu0 %v1295
      %1371 = vmatprep.subr.bf16.mxu0 0
      %1372 = vmatpush2.bf16.msra.mxu0 %v1294
      %1373 = vmatprep.subr.bf16.mxu0 0
      %1374 = vmatpush2.bf16.msra.mxu0 %v1293
      %1375 = vmatprep.subr.bf16.mxu0 0
      %1376 = vmatpush2.bf16.msra.mxu0 %v1292
      %1377 = vmatprep.subr.bf16.mxu0 0
      %1378 = vmatpush2.bf16.msra.mxu0 %v1291
      %1379 = vmatprep.mubr.bf16.mxu0 %v827
      %1380 = vmatmul.mubr.bf16.gmra.mxu0 %v826
      %v1381 = vpop.f32.mrf.mxu0
      %v1382 = vadd.f32 0.0, %v1381
      %v1383 = vpop.f32.mrf.mxu0
      %v1384 = vpop.f32.mrf.mxu0
      %v1385 = vadd.f32 0.0, %v1384
      %v1386 = vpop.f32.mrf.mxu0
      %1387 = vmatprep.mubr.bf16.mxu0 %v831
      %1388 = vmatmul.mubr.bf16.gmra.mxu0 %v830
      %v1389 = vpop.f32.mrf.mxu0
      %v1390 = vadd.f32 0.0, %v1389
      %v1391 = vpop.f32.mrf.mxu0
      %v1392 = vpop.f32.mrf.mxu0
      %v1393 = vadd.f32 0.0, %v1392
      %v1394 = vpop.f32.mrf.mxu0
      %1395 = vmatprep.mubr.bf16.mxu0 %v835
      %1396 = vmatmul.mubr.bf16.gmra.mxu0 %v834
      %v1397 = vpop.f32.mrf.mxu0
      %v1398 = vadd.f32 0.0, %v1397
      %v1399 = vpop.f32.mrf.mxu0
      %v1400 = vpop.f32.mrf.mxu0
      %v1401 = vadd.f32 0.0, %v1400
      %v1402 = vpop.f32.mrf.mxu0
      %1403 = vmatprep.mubr.bf16.mxu0 %v839
      %1404 = vmatmul.mubr.bf16.gmra.mxu0 %v838
      %v1405 = vpop.f32.mrf.mxu0
      %v1406 = vadd.f32 0.0, %v1405
      %v1407 = vpop.f32.mrf.mxu0
      %v1408 = vpop.f32.mrf.mxu0
      %v1409 = vadd.f32 0.0, %v1408
      %v1410 = vpop.f32.mrf.mxu0
      %1411 = vmatprep.mubr.bf16.mxu0 %v843
      %1412 = vmatmul.mubr.bf16.gmra.mxu0 %v842
      %v1413 = vpop.f32.mrf.mxu0
      %v1414 = vadd.f32 0.0, %v1413
      %v1415 = vpop.f32.mrf.mxu0
      %v1416 = vpop.f32.mrf.mxu0
      %v1417 = vadd.f32 0.0, %v1416
      %v1418 = vpop.f32.mrf.mxu0
      %1419 = vmatprep.mubr.bf16.mxu0 %v847
      %1420 = vmatmul.mubr.bf16.gmra.mxu0 %v846
      %v1421 = vpop.f32.mrf.mxu0
      %v1422 = vadd.f32 0.0, %v1421
      %v1423 = vpop.f32.mrf.mxu0
      %v1424 = vpop.f32.mrf.mxu0
      %v1425 = vadd.f32 0.0, %v1424
      %v1426 = vpop.f32.mrf.mxu0
      %1427 = vmatprep.mubr.bf16.mxu0 %v851
      %1428 = vmatmul.mubr.bf16.gmra.mxu0 %v850
      %v1429 = vpop.f32.mrf.mxu0
      %v1430 = vadd.f32 0.0, %v1429
      %v1431 = vpop.f32.mrf.mxu0
      %v1432 = vpop.f32.mrf.mxu0
      %v1433 = vadd.f32 0.0, %v1432
      %v1434 = vpop.f32.mrf.mxu0
      %1435 = vmatprep.mubr.bf16.mxu0 %v855
      %1436 = vmatmul.mubr.bf16.gmra.mxu0 %v854
      %v1437 = vpop.f32.mrf.mxu0
      %v1438 = vadd.f32 0.0, %v1437
      %v1439 = vpop.f32.mrf.mxu0
      %v1440 = vpop.f32.mrf.mxu0
      %v1441 = vadd.f32 0.0, %v1440
      %v1442 = vpop.f32.mrf.mxu0
      %1443 = vdwg.mxu0
      %1444 = vmatprep.subr.bf16.mxu0 0
      %1445 = vmatpush1.bf16.msra.mxu0 %v1306
      %1446 = vmatprep.subr.bf16.mxu0 0
      %1447 = vmatpush1.bf16.msra.mxu0 %v1305
      %1448 = vmatprep.subr.bf16.mxu0 0
      %1449 = vmatpush1.bf16.msra.mxu0 %v1304
      %1450 = vmatprep.subr.bf16.mxu0 0
      %1451 = vmatpush1.bf16.msra.mxu0 %v1303
      %1452 = vmatprep.subr.bf16.mxu0 0
      %1453 = vmatpush1.bf16.msra.mxu0 %v1302
      %1454 = vmatprep.subr.bf16.mxu0 0
      %1455 = vmatpush1.bf16.msra.mxu0 %v1301
      %1456 = vmatprep.subr.bf16.mxu0 0
      %1457 = vmatpush1.bf16.msra.mxu0 %v1300
      %1458 = vmatprep.subr.bf16.mxu0 0
      %1459 = vmatpush1.bf16.msra.mxu0 %v1299
      %1460 = vmatprep.subr.bf16.mxu0 0
      %1461 = vmatpush2.bf16.msra.mxu0 %v1314
      %1462 = vmatprep.subr.bf16.mxu0 0
      %1463 = vmatpush2.bf16.msra.mxu0 %v1313
      %1464 = vmatprep.subr.bf16.mxu0 0
      %1465 = vmatpush2.bf16.msra.mxu0 %v1312
      %1466 = vmatprep.subr.bf16.mxu0 0
      %1467 = vmatpush2.bf16.msra.mxu0 %v1311
      %1468 = vmatprep.subr.bf16.mxu0 0
      %1469 = vmatpush2.bf16.msra.mxu0 %v1310
      %1470 = vmatprep.subr.bf16.mxu0 0
      %1471 = vmatpush2.bf16.msra.mxu0 %v1309
      %1472 = vmatprep.subr.bf16.mxu0 0
      %1473 = vmatpush2.bf16.msra.mxu0 %v1308
      %1474 = vmatprep.subr.bf16.mxu0 0
      %1475 = vmatpush2.bf16.msra.mxu0 %v1307
      %1476 = vmatprep.mubr.bf16.mxu0 %v829
      %1477 = vmatmul.mubr.bf16.gmra.mxu0 %v828
      %v1478 = vpop.f32.mrf.mxu0
      %v1479 = vadd.f32 %v1382, %v1478
      %v1480 = vpop.f32.mrf.mxu0
      %v1481 = vpop.f32.mrf.mxu0
      %v1482 = vadd.f32 %v1385, %v1481
      %v1483 = vpop.f32.mrf.mxu0
      %1484 = vmatprep.mubr.bf16.mxu0 %v833
      %1485 = vmatmul.mubr.bf16.gmra.mxu0 %v832
      %v1486 = vpop.f32.mrf.mxu0
      %v1487 = vadd.f32 %v1390, %v1486
      %v1488 = vpop.f32.mrf.mxu0
      %v1489 = vpop.f32.mrf.mxu0
      %v1490 = vadd.f32 %v1393, %v1489
      %v1491 = vpop.f32.mrf.mxu0
      %1492 = vmatprep.mubr.bf16.mxu0 %v837
      %1493 = vmatmul.mubr.bf16.gmra.mxu0 %v836
      %v1494 = vpop.f32.mrf.mxu0
      %v1495 = vadd.f32 %v1398, %v1494
      %v1496 = vpop.f32.mrf.mxu0
      %v1497 = vpop.f32.mrf.mxu0
      %v1498 = vadd.f32 %v1401, %v1497
      %v1499 = vpop.f32.mrf.mxu0
      %1500 = vmatprep.mubr.bf16.mxu0 %v841
      %1501 = vmatmul.mubr.bf16.gmra.mxu0 %v840
      %v1502 = vpop.f32.mrf.mxu0
      %v1503 = vadd.f32 %v1406, %v1502
      %v1504 = vpop.f32.mrf.mxu0
      %v1505 = vpop.f32.mrf.mxu0
      %v1506 = vadd.f32 %v1409, %v1505
      %v1507 = vpop.f32.mrf.mxu0
      %1508 = vmatprep.mubr.bf16.mxu0 %v845
      %1509 = vmatmul.mubr.bf16.gmra.mxu0 %v844
      %v1510 = vpop.f32.mrf.mxu0
      %v1511 = vadd.f32 %v1414, %v1510
      %v1512 = vpop.f32.mrf.mxu0
      %v1513 = vpop.f32.mrf.mxu0
      %v1514 = vadd.f32 %v1417, %v1513
      %v1515 = vpop.f32.mrf.mxu0
      %1516 = vmatprep.mubr.bf16.mxu0 %v849
      %1517 = vmatmul.mubr.bf16.gmra.mxu0 %v848
      %v1518 = vpop.f32.mrf.mxu0
      %v1519 = vadd.f32 %v1422, %v1518
      %v1520 = vpop.f32.mrf.mxu0
      %v1521 = vpop.f32.mrf.mxu0
      %v1522 = vadd.f32 %v1425, %v1521
      %v1523 = vpop.f32.mrf.mxu0
      %1524 = vmatprep.mubr.bf16.mxu0 %v853
      %1525 = vmatmul.mubr.bf16.gmra.mxu0 %v852
      %v1526 = vpop.f32.mrf.mxu0
      %v1527 = vadd.f32 %v1430, %v1526
      %v1528 = vpop.f32.mrf.mxu0
      %v1529 = vpop.f32.mrf.mxu0
      %v1530 = vadd.f32 %v1433, %v1529
      %v1531 = vpop.f32.mrf.mxu0
      %1532 = vmatprep.mubr.bf16.mxu0 %v857
      %1533 = vmatmul.mubr.bf16.gmra.mxu0 %v856
      %v1534 = vpop.f32.mrf.mxu0
      %v1535 = vadd.f32 %v1438, %v1534
      %v1536 = vpop.f32.mrf.mxu0
      %v1537 = vpop.f32.mrf.mxu0
      %v1538 = vadd.f32 %v1441, %v1537
      %v1539 = vpop.f32.mrf.mxu0
      %1540 = vdwg.mxu0
      %v1541 = vpack.c.bf16 %v1482, %v1479
      %v1542 = vpack.c.bf16 %v1490, %v1487
      %v1543 = vpack.c.bf16 %v1498, %v1495
      %v1544 = vpack.c.bf16 %v1506, %v1503
      %v1545 = vpack.c.bf16 %v1514, %v1511
      %v1546 = vpack.c.bf16 %v1522, %v1519
      %v1547 = vpack.c.bf16 %v1530, %v1527
      %v1548 = vpack.c.bf16 %v1538, %v1535
      %v1549 = vld [vmem:[%s4] sm:$0xf]
      %v1550 = vld [vmem:[%s4 + $0x4] sm:$0xf]
      %v1551 = vld [vmem:[%s4 + $0x8] sm:$0xf]
      %v1552 = vld [vmem:[%s4 + $0xc] sm:$0xf]
      %v1553 = vld [vmem:[%s4 + $0x10] sm:$0xf]
      %v1554 = vld [vmem:[%s4 + $0x14] sm:$0xf]
      %v1555 = vld [vmem:[%s4 + $0x18] sm:$0xf]
      %v1556 = vld [vmem:[%s4 + $0x1c] sm:$0xf]
      %v1557 = vld [vmem:[%s4 + $0x20] sm:$0xf]
      %v1558 = vld [vmem:[%s4 + $0x24] sm:$0xf]
      %v1559 = vld [vmem:[%s4 + $0x28] sm:$0xf]
      %v1560 = vld [vmem:[%s4 + $0x2c] sm:$0xf]
      %v1561 = vld [vmem:[%s4 + $0x30] sm:$0xf]
      %v1562 = vld [vmem:[%s4 + $0x34] sm:$0xf]
      %v1563 = vld [vmem:[%s4 + $0x38] sm:$0xf]
      %v1564 = vld [vmem:[%s4 + $0x3c] sm:$0xf]
      %v1565 = vld [vmem:[%s5] sm:$0x1]
      %v1567 = vlaneseq
      %v1568 = vshrl.u32 %v1567, 7
      %v1569 = vsub.s32 0, %v1568
      %v1570 = vrot.slane %v1565, %v1569
      %v1588 = vunpack.c.l.b16 %v1549
      %v1589 = vunpack.c.l.b16 %v1550
      %v1590 = vunpack.c.l.b16 %v1551
      %v1591 = vunpack.c.l.b16 %v1552
      %v1592 = vunpack.c.l.b16 %v1553
      %v1593 = vunpack.c.l.b16 %v1554
      %v1594 = vunpack.c.l.b16 %v1555
      %v1595 = vunpack.c.l.b16 %v1556
      %v1596 = vunpack.c.l.b16 %v1557
      %v1597 = vunpack.c.l.b16 %v1558
      %v1598 = vunpack.c.l.b16 %v1559
      %v1599 = vunpack.c.l.b16 %v1560
      %v1600 = vunpack.c.l.b16 %v1561
      %v1601 = vunpack.c.l.b16 %v1562
      %v1602 = vunpack.c.l.b16 %v1563
      %v1603 = vunpack.c.l.b16 %v1564
      %v1604 = vpack.c.b16 %v1589, %v1588
      %v1605 = vpack.c.b16 %v1591, %v1590
      %v1606 = vpack.c.b16 %v1593, %v1592
      %v1607 = vpack.c.b16 %v1595, %v1594
      %v1608 = vpack.c.b16 %v1597, %v1596
      %v1609 = vpack.c.b16 %v1599, %v1598
      %v1610 = vpack.c.b16 %v1601, %v1600
      %v1611 = vpack.c.b16 %v1603, %v1602
      %1620 = vmatprep.subr.bf16.mxu0 0
      %1621 = vmatpush1.bf16.msra.mxu0 %v1611
      %1622 = vmatprep.subr.bf16.mxu0 0
      %1623 = vmatpush1.bf16.msra.mxu0 %v1610
      %1624 = vmatprep.subr.bf16.mxu0 0
      %1625 = vmatpush1.bf16.msra.mxu0 %v1609
      %1626 = vmatprep.subr.bf16.mxu0 0
      %1627 = vmatpush1.bf16.msra.mxu0 %v1608
      %1628 = vmatprep.subr.bf16.mxu0 0
      %1629 = vmatpush1.bf16.msra.mxu0 %v1607
      %1630 = vmatprep.subr.bf16.mxu0 0
      %1631 = vmatpush1.bf16.msra.mxu0 %v1606
      %1632 = vmatprep.subr.bf16.mxu0 0
      %1633 = vmatpush1.bf16.msra.mxu0 %v1605
      %1634 = vmatprep.subr.bf16.mxu0 0
      %1635 = vmatpush1.bf16.msra.mxu0 %v1604
      %1636 = vmatprep.subr.bf16.mxu0 0
      %1637 = vmatpush2.bf16.msra.mxu0 0
      %1638 = vmatprep.subr.bf16.mxu0 0
      %1639 = vmatpush2.bf16.msra.mxu0 0
      %1640 = vmatprep.subr.bf16.mxu0 0
      %1641 = vmatpush2.bf16.msra.mxu0 0
      %1642 = vmatprep.subr.bf16.mxu0 0
      %1643 = vmatpush2.bf16.msra.mxu0 0
      %1644 = vmatprep.subr.bf16.mxu0 0
      %1645 = vmatpush2.bf16.msra.mxu0 0
      %1646 = vmatprep.subr.bf16.mxu0 0
      %1647 = vmatpush2.bf16.msra.mxu0 0
      %1648 = vmatprep.subr.bf16.mxu0 0
      %1649 = vmatpush2.bf16.msra.mxu0 0
      %1650 = vmatprep.subr.bf16.mxu0 0
      %1651 = vmatpush2.bf16.msra.mxu0 0
      %1652 = vmatprep.mubr.bf16.mxu0 0
      %1653 = vmatmul.mubr.bf16.gmra.mxu0 %v1083
      %v1654 = vpop.f32.mrf.mxu0
      %v1655 = vadd.f32 %v1570, %v1654
      %v1656 = vpop.f32.mrf.mxu0
      %v1657 = vpop.f32.mrf.mxu0
      %v1658 = vadd.f32 %v1570, %v1657
      %v1659 = vpop.f32.mrf.mxu0
      %1660 = vmatprep.mubr.bf16.mxu0 0
      %1661 = vmatmul.mubr.bf16.gmra.mxu0 %v1084
      %v1662 = vpop.f32.mrf.mxu0
      %v1663 = vadd.f32 %v1570, %v1662
      %v1664 = vpop.f32.mrf.mxu0
      %v1665 = vpop.f32.mrf.mxu0
      %v1666 = vadd.f32 %v1570, %v1665
      %v1667 = vpop.f32.mrf.mxu0
      %1668 = vmatprep.mubr.bf16.mxu0 0
      %1669 = vmatmul.mubr.bf16.gmra.mxu0 %v1085
      %v1670 = vpop.f32.mrf.mxu0
      %v1671 = vadd.f32 %v1570, %v1670
      %v1672 = vpop.f32.mrf.mxu0
      %v1673 = vpop.f32.mrf.mxu0
      %v1674 = vadd.f32 %v1570, %v1673
      %v1675 = vpop.f32.mrf.mxu0
      %1676 = vmatprep.mubr.bf16.mxu0 0
      %1677 = vmatmul.mubr.bf16.gmra.mxu0 %v1086
      %v1678 = vpop.f32.mrf.mxu0
      %v1679 = vadd.f32 %v1570, %v1678
      %v1680 = vpop.f32.mrf.mxu0
      %v1681 = vpop.f32.mrf.mxu0
      %v1682 = vadd.f32 %v1570, %v1681
      %v1683 = vpop.f32.mrf.mxu0
      %1684 = vmatprep.mubr.bf16.mxu0 0
      %1685 = vmatmul.mubr.bf16.gmra.mxu0 %v1087
      %v1686 = vpop.f32.mrf.mxu0
      %v1687 = vadd.f32 %v1570, %v1686
      %v1688 = vpop.f32.mrf.mxu0
      %v1689 = vpop.f32.mrf.mxu0
      %v1690 = vadd.f32 %v1570, %v1689
      %v1691 = vpop.f32.mrf.mxu0
      %1692 = vmatprep.mubr.bf16.mxu0 0
      %1693 = vmatmul.mubr.bf16.gmra.mxu0 %v1088
      %v1694 = vpop.f32.mrf.mxu0
      %v1695 = vadd.f32 %v1570, %v1694
      %v1696 = vpop.f32.mrf.mxu0
      %v1697 = vpop.f32.mrf.mxu0
      %v1698 = vadd.f32 %v1570, %v1697
      %v1699 = vpop.f32.mrf.mxu0
      %1700 = vmatprep.mubr.bf16.mxu0 0
      %1701 = vmatmul.mubr.bf16.gmra.mxu0 %v1089
      %v1702 = vpop.f32.mrf.mxu0
      %v1703 = vadd.f32 %v1570, %v1702
      %v1704 = vpop.f32.mrf.mxu0
      %v1705 = vpop.f32.mrf.mxu0
      %v1706 = vadd.f32 %v1570, %v1705
      %v1707 = vpop.f32.mrf.mxu0
      %1708 = vmatprep.mubr.bf16.mxu0 0
      %1709 = vmatmul.mubr.bf16.gmra.mxu0 %v1090
      %v1710 = vpop.f32.mrf.mxu0
      %v1711 = vadd.f32 %v1570, %v1710
      %v1712 = vpop.f32.mrf.mxu0
      %v1713 = vpop.f32.mrf.mxu0
      %v1714 = vadd.f32 %v1570, %v1713
      %v1715 = vpop.f32.mrf.mxu0
      %1716 = vdwg.mxu0
      %v1717 = vmax.f32 %v1655, 0.0
      %v1718 = vmax.f32 %v1658, 0.0
      %v1719 = vmax.f32 %v1663, 0.0
      %v1720 = vmax.f32 %v1666, 0.0
      %v1721 = vmax.f32 %v1671, 0.0
      %v1722 = vmax.f32 %v1674, 0.0
      %v1723 = vmax.f32 %v1679, 0.0
      %v1724 = vmax.f32 %v1682, 0.0
      %v1725 = vmax.f32 %v1687, 0.0
      %v1726 = vmax.f32 %v1690, 0.0
      %v1727 = vmax.f32 %v1695, 0.0
      %v1728 = vmax.f32 %v1698, 0.0
      %v1729 = vmax.f32 %v1703, 0.0
      %v1730 = vmax.f32 %v1706, 0.0
      %v1731 = vmax.f32 %v1711, 0.0
      %v1732 = vmax.f32 %v1714, 0.0
      %v1733 = vld [vmem:[%s6] sm:$0xf]
      %v1734 = vld [vmem:[%s6 + $0x4] sm:$0xf]
      %v1735 = vld [vmem:[%s6 + $0x8] sm:$0xf]
      %v1736 = vld [vmem:[%s6 + $0xc] sm:$0xf]
      %v1737 = vld [vmem:[%s6 + $0x10] sm:$0xf]
      %v1738 = vld [vmem:[%s6 + $0x14] sm:$0xf]
      %v1739 = vld [vmem:[%s6 + $0x18] sm:$0xf]
      %v1740 = vld [vmem:[%s6 + $0x1c] sm:$0xf]
      %v1741 = vld [vmem:[%s6 + $0x20] sm:$0xf]
      %v1742 = vld [vmem:[%s6 + $0x24] sm:$0xf]
      %v1743 = vld [vmem:[%s6 + $0x28] sm:$0xf]
      %v1744 = vld [vmem:[%s6 + $0x2c] sm:$0xf]
      %v1745 = vld [vmem:[%s6 + $0x30] sm:$0xf]
      %v1746 = vld [vmem:[%s6 + $0x34] sm:$0xf]
      %v1747 = vld [vmem:[%s6 + $0x38] sm:$0xf]
      %v1748 = vld [vmem:[%s6 + $0x3c] sm:$0xf]
      %v1749 = vld [vmem:[%s7] sm:$0x1]
      %v1751 = vlaneseq
      %v1752 = vshrl.u32 %v1751, 7
      %v1753 = vsub.s32 0, %v1752
      %v1754 = vrot.slane %v1749, %v1753
      %v1772 = vunpack.c.l.b16 %v1733
      %v1773 = vunpack.c.l.b16 %v1734
      %v1774 = vunpack.c.l.b16 %v1735
      %v1775 = vunpack.c.l.b16 %v1736
      %v1776 = vunpack.c.l.b16 %v1737
      %v1777 = vunpack.c.l.b16 %v1738
      %v1778 = vunpack.c.l.b16 %v1739
      %v1779 = vunpack.c.l.b16 %v1740
      %v1780 = vunpack.c.l.b16 %v1741
      %v1781 = vunpack.c.l.b16 %v1742
      %v1782 = vunpack.c.l.b16 %v1743
      %v1783 = vunpack.c.l.b16 %v1744
      %v1784 = vunpack.c.l.b16 %v1745
      %v1785 = vunpack.c.l.b16 %v1746
      %v1786 = vunpack.c.l.b16 %v1747
      %v1787 = vunpack.c.l.b16 %v1748
      %v1788 = vpack.c.b16 %v1773, %v1772
      %v1789 = vpack.c.b16 %v1775, %v1774
      %v1790 = vpack.c.b16 %v1777, %v1776
      %v1791 = vpack.c.b16 %v1779, %v1778
      %v1792 = vpack.c.b16 %v1781, %v1780
      %v1793 = vpack.c.b16 %v1783, %v1782
      %v1794 = vpack.c.b16 %v1785, %v1784
      %v1795 = vpack.c.b16 %v1787, %v1786
      %1804 = vmatprep.subr.bf16.mxu0 0
      %1805 = vmatpush1.bf16.msra.mxu0 %v1795
      %1806 = vmatprep.subr.bf16.mxu0 0
      %1807 = vmatpush1.bf16.msra.mxu0 %v1794
      %1808 = vmatprep.subr.bf16.mxu0 0
      %1809 = vmatpush1.bf16.msra.mxu0 %v1793
      %1810 = vmatprep.subr.bf16.mxu0 0
      %1811 = vmatpush1.bf16.msra.mxu0 %v1792
      %1812 = vmatprep.subr.bf16.mxu0 0
      %1813 = vmatpush1.bf16.msra.mxu0 %v1791
      %1814 = vmatprep.subr.bf16.mxu0 0
      %1815 = vmatpush1.bf16.msra.mxu0 %v1790
      %1816 = vmatprep.subr.bf16.mxu0 0
      %1817 = vmatpush1.bf16.msra.mxu0 %v1789
      %1818 = vmatprep.subr.bf16.mxu0 0
      %1819 = vmatpush1.bf16.msra.mxu0 %v1788
      %1820 = vmatprep.subr.bf16.mxu0 0
      %1821 = vmatpush2.bf16.msra.mxu0 0
      %1822 = vmatprep.subr.bf16.mxu0 0
      %1823 = vmatpush2.bf16.msra.mxu0 0
      %1824 = vmatprep.subr.bf16.mxu0 0
      %1825 = vmatpush2.bf16.msra.mxu0 0
      %1826 = vmatprep.subr.bf16.mxu0 0
      %1827 = vmatpush2.bf16.msra.mxu0 0
      %1828 = vmatprep.subr.bf16.mxu0 0
      %1829 = vmatpush2.bf16.msra.mxu0 0
      %1830 = vmatprep.subr.bf16.mxu0 0
      %1831 = vmatpush2.bf16.msra.mxu0 0
      %1832 = vmatprep.subr.bf16.mxu0 0
      %1833 = vmatpush2.bf16.msra.mxu0 0
      %1834 = vmatprep.subr.bf16.mxu0 0
      %1835 = vmatpush2.bf16.msra.mxu0 0
      %1836 = vmatprep.mubr.bf16.mxu0 0
      %1837 = vmatmul.mubr.bf16.gmra.mxu0 %v1541
      %v1838 = vpop.f32.mrf.mxu0
      %v1839 = vadd.f32 %v1754, %v1838
      %v1840 = vpop.f32.mrf.mxu0
      %v1841 = vpop.f32.mrf.mxu0
      %v1842 = vadd.f32 %v1754, %v1841
      %v1843 = vpop.f32.mrf.mxu0
      %1844 = vmatprep.mubr.bf16.mxu0 0
      %1845 = vmatmul.mubr.bf16.gmra.mxu0 %v1542
      %v1846 = vpop.f32.mrf.mxu0
      %v1847 = vadd.f32 %v1754, %v1846
      %v1848 = vpop.f32.mrf.mxu0
      %v1849 = vpop.f32.mrf.mxu0
      %v1850 = vadd.f32 %v1754, %v1849
      %v1851 = vpop.f32.mrf.mxu0
      %1852 = vmatprep.mubr.bf16.mxu0 0
      %1853 = vmatmul.mubr.bf16.gmra.mxu0 %v1543
      %v1854 = vpop.f32.mrf.mxu0
      %v1855 = vadd.f32 %v1754, %v1854
      %v1856 = vpop.f32.mrf.mxu0
      %v1857 = vpop.f32.mrf.mxu0
      %v1858 = vadd.f32 %v1754, %v1857
      %v1859 = vpop.f32.mrf.mxu0
      %1860 = vmatprep.mubr.bf16.mxu0 0
      %1861 = vmatmul.mubr.bf16.gmra.mxu0 %v1544
      %v1862 = vpop.f32.mrf.mxu0
      %v1863 = vadd.f32 %v1754, %v1862
      %v1864 = vpop.f32.mrf.mxu0
      %v1865 = vpop.f32.mrf.mxu0
      %v1866 = vadd.f32 %v1754, %v1865
      %v1867 = vpop.f32.mrf.mxu0
      %1868 = vmatprep.mubr.bf16.mxu0 0
      %1869 = vmatmul.mubr.bf16.gmra.mxu0 %v1545
      %v1870 = vpop.f32.mrf.mxu0
      %v1871 = vadd.f32 %v1754, %v1870
      %v1872 = vpop.f32.mrf.mxu0
      %v1873 = vpop.f32.mrf.mxu0
      %v1874 = vadd.f32 %v1754, %v1873
      %v1875 = vpop.f32.mrf.mxu0
      %1876 = vmatprep.mubr.bf16.mxu0 0
      %1877 = vmatmul.mubr.bf16.gmra.mxu0 %v1546
      %v1878 = vpop.f32.mrf.mxu0
      %v1879 = vadd.f32 %v1754, %v1878
      %v1880 = vpop.f32.mrf.mxu0
      %v1881 = vpop.f32.mrf.mxu0
      %v1882 = vadd.f32 %v1754, %v1881
      %v1883 = vpop.f32.mrf.mxu0
      %1884 = vmatprep.mubr.bf16.mxu0 0
      %1885 = vmatmul.mubr.bf16.gmra.mxu0 %v1547
      %v1886 = vpop.f32.mrf.mxu0
      %v1887 = vadd.f32 %v1754, %v1886
      %v1888 = vpop.f32.mrf.mxu0
      %v1889 = vpop.f32.mrf.mxu0
      %v1890 = vadd.f32 %v1754, %v1889
      %v1891 = vpop.f32.mrf.mxu0
      %1892 = vmatprep.mubr.bf16.mxu0 0
      %1893 = vmatmul.mubr.bf16.gmra.mxu0 %v1548
      %v1894 = vpop.f32.mrf.mxu0
      %v1895 = vadd.f32 %v1754, %v1894
      %v1896 = vpop.f32.mrf.mxu0
      %v1897 = vpop.f32.mrf.mxu0
      %v1898 = vadd.f32 %v1754, %v1897
      %v1899 = vpop.f32.mrf.mxu0
      %1900 = vdwg.mxu0
      %v1901 = vmax.f32 %v1839, 0.0
      %v1902 = vmax.f32 %v1842, 0.0
      %v1903 = vmax.f32 %v1847, 0.0
      %v1904 = vmax.f32 %v1850, 0.0
      %v1905 = vmax.f32 %v1855, 0.0
      %v1906 = vmax.f32 %v1858, 0.0
      %v1907 = vmax.f32 %v1863, 0.0
      %v1908 = vmax.f32 %v1866, 0.0
      %v1909 = vmax.f32 %v1871, 0.0
      %v1910 = vmax.f32 %v1874, 0.0
      %v1911 = vmax.f32 %v1879, 0.0
      %v1912 = vmax.f32 %v1882, 0.0
      %v1913 = vmax.f32 %v1887, 0.0
      %v1914 = vmax.f32 %v1890, 0.0
      %v1915 = vmax.f32 %v1895, 0.0
      %v1916 = vmax.f32 %v1898, 0.0
      %1917 = vst [vmem:[%s476] sm:$0xff] %v1717
      %1918 = vst [vmem:[%s476 + $0x10] sm:$0xff] %v1718
      %1919 = vst [vmem:[%s476 + $0x20] sm:$0xff] %v1719
      %1920 = vst [vmem:[%s476 + $0x30] sm:$0xff] %v1720
      %1921 = vst [vmem:[%s476 + $0x40] sm:$0xff] %v1721
      %1922 = vst [vmem:[%s476 + $0x50] sm:$0xff] %v1722
      %1923 = vst [vmem:[%s476 + $0x60] sm:$0xff] %v1723
      %1924 = vst [vmem:[%s476 + $0x70] sm:$0xff] %v1724
      %1925 = vst [vmem:[%s476 + $0x80] sm:$0xff] %v1725
      %1926 = vst [vmem:[%s476 + $0x90] sm:$0xff] %v1726
      %1927 = vst [vmem:[%s476 + $0xa0] sm:$0xff] %v1727
      %1928 = vst [vmem:[%s476 + $0xb0] sm:$0xff] %v1728
      %1929 = vst [vmem:[%s476 + $0xc0] sm:$0xff] %v1729
      %1930 = vst [vmem:[%s476 + $0xd0] sm:$0xff] %v1730
      %1931 = vst [vmem:[%s476 + $0xe0] sm:$0xff] %v1731
      %1932 = vst [vmem:[%s476 + $0xf0] sm:$0xff] %v1732
      %1933 = vst [vmem:[%s476 + $0x8] sm:$0xff] %v1901
      %1934 = vst [vmem:[%s476 + $0x18] sm:$0xff] %v1902
      %1935 = vst [vmem:[%s476 + $0x28] sm:$0xff] %v1903
      %1936 = vst [vmem:[%s476 + $0x38] sm:$0xff] %v1904
      %1937 = vst [vmem:[%s476 + $0x48] sm:$0xff] %v1905
      %1938 = vst [vmem:[%s476 + $0x58] sm:$0xff] %v1906
      %1939 = vst [vmem:[%s476 + $0x68] sm:$0xff] %v1907
      %1940 = vst [vmem:[%s476 + $0x78] sm:$0xff] %v1908
      %1941 = vst [vmem:[%s476 + $0x88] sm:$0xff] %v1909
      %1942 = vst [vmem:[%s476 + $0x98] sm:$0xff] %v1910
      %1943 = vst [vmem:[%s476 + $0xa8] sm:$0xff] %v1911
      %1944 = vst [vmem:[%s476 + $0xb8] sm:$0xff] %v1912
      %1945 = vst [vmem:[%s476 + $0xc8] sm:$0xff] %v1913
      %1946 = vst [vmem:[%s476 + $0xd8] sm:$0xff] %v1914
      %1947 = vst [vmem:[%s476 + $0xe8] sm:$0xff] %v1915
      %1948 = vst [vmem:[%s476 + $0xf8] sm:$0xff] %v1916
      %v1949 = vld [vmem:[%s476] sm:$0xff]
      %v1950 = vld [vmem:[%s476 + $0x8] sm:$0xff]
      %v1951 = vld [vmem:[%s476 + $0x10] sm:$0xff]
      %v1952 = vld [vmem:[%s476 + $0x18] sm:$0xff]
      %v1953 = vld [vmem:[%s476 + $0x20] sm:$0xff]
      %v1954 = vld [vmem:[%s476 + $0x28] sm:$0xff]
      %v1955 = vld [vmem:[%s476 + $0x30] sm:$0xff]
      %v1956 = vld [vmem:[%s476 + $0x38] sm:$0xff]
      %v1957 = vld [vmem:[%s476 + $0x40] sm:$0xff]
      %v1958 = vld [vmem:[%s476 + $0x48] sm:$0xff]
      %v1959 = vld [vmem:[%s476 + $0x50] sm:$0xff]
      %v1960 = vld [vmem:[%s476 + $0x58] sm:$0xff]
      %v1961 = vld [vmem:[%s476 + $0x60] sm:$0xff]
      %v1962 = vld [vmem:[%s476 + $0x68] sm:$0xff]
      %v1963 = vld [vmem:[%s476 + $0x70] sm:$0xff]
      %v1964 = vld [vmem:[%s476 + $0x78] sm:$0xff]
      %v1965 = vld [vmem:[%s476 + $0x80] sm:$0xff]
      %v1966 = vld [vmem:[%s476 + $0x88] sm:$0xff]
      %v1967 = vld [vmem:[%s476 + $0x90] sm:$0xff]
      %v1968 = vld [vmem:[%s476 + $0x98] sm:$0xff]
      %v1969 = vld [vmem:[%s476 + $0xa0] sm:$0xff]
      %v1970 = vld [vmem:[%s476 + $0xa8] sm:$0xff]
      %v1971 = vld [vmem:[%s476 + $0xb0] sm:$0xff]
      %v1972 = vld [vmem:[%s476 + $0xb8] sm:$0xff]
      %v1973 = vld [vmem:[%s476 + $0xc0] sm:$0xff]
      %v1974 = vld [vmem:[%s476 + $0xc8] sm:$0xff]
      %v1975 = vld [vmem:[%s476 + $0xd0] sm:$0xff]
      %v1976 = vld [vmem:[%s476 + $0xd8] sm:$0xff]
      %v1977 = vld [vmem:[%s476 + $0xe0] sm:$0xff]
      %v1978 = vld [vmem:[%s476 + $0xe8] sm:$0xff]
      %v1979 = vld [vmem:[%s476 + $0xf0] sm:$0xff]
      %v1980 = vld [vmem:[%s476 + $0xf8] sm:$0xff]
      %v1981 = vpack.c.bf16 %v1951, %v1949
      %v1982 = vpack.c.bf16 %v1952, %v1950
      %v1983 = vpack.c.bf16 %v1955, %v1953
      %v1984 = vpack.c.bf16 %v1956, %v1954
      %v1985 = vpack.c.bf16 %v1959, %v1957
      %v1986 = vpack.c.bf16 %v1960, %v1958
      %v1987 = vpack.c.bf16 %v1963, %v1961
      %v1988 = vpack.c.bf16 %v1964, %v1962
      %v1989 = vpack.c.bf16 %v1967, %v1965
      %v1990 = vpack.c.bf16 %v1968, %v1966
      %v1991 = vpack.c.bf16 %v1971, %v1969
      %v1992 = vpack.c.bf16 %v1972, %v1970
      %v1993 = vpack.c.bf16 %v1975, %v1973
      %v1994 = vpack.c.bf16 %v1976, %v1974
      %v1995 = vpack.c.bf16 %v1979, %v1977
      %v1996 = vpack.c.bf16 %v1980, %v1978
      %v1997 = vld [vmem:[%s8] sm:$0xf]
      %v1998 = vld [vmem:[%s8 + $0x4] sm:$0xf]
      %v1999 = vld [vmem:[%s8 + $0x8] sm:$0xf]
      %v2000 = vld [vmem:[%s8 + $0xc] sm:$0xf]
      %v2001 = vld [vmem:[%s8 + $0x10] sm:$0xf]
      %v2002 = vld [vmem:[%s8 + $0x14] sm:$0xf]
      %v2003 = vld [vmem:[%s8 + $0x18] sm:$0xf]
      %v2004 = vld [vmem:[%s8 + $0x1c] sm:$0xf]
      %v2005 = vld [vmem:[%s8 + $0x20] sm:$0xf]
      %v2006 = vld [vmem:[%s8 + $0x24] sm:$0xf]
      %v2007 = vld [vmem:[%s8 + $0x28] sm:$0xf]
      %v2008 = vld [vmem:[%s8 + $0x2c] sm:$0xf]
      %v2009 = vld [vmem:[%s8 + $0x30] sm:$0xf]
      %v2010 = vld [vmem:[%s8 + $0x34] sm:$0xf]
      %v2011 = vld [vmem:[%s8 + $0x38] sm:$0xf]
      %v2012 = vld [vmem:[%s8 + $0x3c] sm:$0xf]
      %v2013 = vld [vmem:[%s8 + $0x40] sm:$0xf]
      %v2014 = vld [vmem:[%s8 + $0x44] sm:$0xf]
      %v2015 = vld [vmem:[%s8 + $0x48] sm:$0xf]
      %v2016 = vld [vmem:[%s8 + $0x4c] sm:$0xf]
      %v2017 = vld [vmem:[%s8 + $0x50] sm:$0xf]
      %v2018 = vld [vmem:[%s8 + $0x54] sm:$0xf]
      %v2019 = vld [vmem:[%s8 + $0x58] sm:$0xf]
      %v2020 = vld [vmem:[%s8 + $0x5c] sm:$0xf]
      %v2021 = vld [vmem:[%s8 + $0x60] sm:$0xf]
      %v2022 = vld [vmem:[%s8 + $0x64] sm:$0xf]
      %v2023 = vld [vmem:[%s8 + $0x68] sm:$0xf]
      %v2024 = vld [vmem:[%s8 + $0x6c] sm:$0xf]
      %v2025 = vld [vmem:[%s8 + $0x70] sm:$0xf]
      %v2026 = vld [vmem:[%s8 + $0x74] sm:$0xf]
      %v2027 = vld [vmem:[%s8 + $0x78] sm:$0xf]
      %v2028 = vld [vmem:[%s8 + $0x7c] sm:$0xf]
      %v2029 = vld [vmem:[%s9] sm:$0x1]
      %v2031 = vlaneseq
      %v2032 = vshrl.u32 %v2031, 7
      %v2033 = vsub.s32 0, %v2032
      %v2034 = vrot.slane %v2029, %v2033
      %v2068 = vunpack.c.l.b16 %v1997
      %v2069 = vunpack.c.l.b16 %v1998
      %v2070 = vunpack.c.l.b16 %v1999
      %v2071 = vunpack.c.l.b16 %v2000
      %v2072 = vunpack.c.l.b16 %v2001
      %v2073 = vunpack.c.l.b16 %v2002
      %v2074 = vunpack.c.l.b16 %v2003
      %v2075 = vunpack.c.l.b16 %v2004
      %v2076 = vunpack.c.l.b16 %v2005
      %v2077 = vunpack.c.l.b16 %v2006
      %v2078 = vunpack.c.l.b16 %v2007
      %v2079 = vunpack.c.l.b16 %v2008
      %v2080 = vunpack.c.l.b16 %v2009
      %v2081 = vunpack.c.l.b16 %v2010
      %v2082 = vunpack.c.l.b16 %v2011
      %v2083 = vunpack.c.l.b16 %v2012
      %v2084 = vunpack.c.l.b16 %v2013
      %v2085 = vunpack.c.l.b16 %v2014
      %v2086 = vunpack.c.l.b16 %v2015
      %v2087 = vunpack.c.l.b16 %v2016
      %v2088 = vunpack.c.l.b16 %v2017
      %v2089 = vunpack.c.l.b16 %v2018
      %v2090 = vunpack.c.l.b16 %v2019
      %v2091 = vunpack.c.l.b16 %v2020
      %v2092 = vunpack.c.l.b16 %v2021
      %v2093 = vunpack.c.l.b16 %v2022
      %v2094 = vunpack.c.l.b16 %v2023
      %v2095 = vunpack.c.l.b16 %v2024
      %v2096 = vunpack.c.l.b16 %v2025
      %v2097 = vunpack.c.l.b16 %v2026
      %v2098 = vunpack.c.l.b16 %v2027
      %v2099 = vunpack.c.l.b16 %v2028
      %v2100 = vpack.c.b16 %v2069, %v2068
      %v2101 = vpack.c.b16 %v2071, %v2070
      %v2102 = vpack.c.b16 %v2073, %v2072
      %v2103 = vpack.c.b16 %v2075, %v2074
      %v2104 = vpack.c.b16 %v2077, %v2076
      %v2105 = vpack.c.b16 %v2079, %v2078
      %v2106 = vpack.c.b16 %v2081, %v2080
      %v2107 = vpack.c.b16 %v2083, %v2082
      %v2108 = vpack.c.b16 %v2085, %v2084
      %v2109 = vpack.c.b16 %v2087, %v2086
      %v2110 = vpack.c.b16 %v2089, %v2088
      %v2111 = vpack.c.b16 %v2091, %v2090
      %v2112 = vpack.c.b16 %v2093, %v2092
      %v2113 = vpack.c.b16 %v2095, %v2094
      %v2114 = vpack.c.b16 %v2097, %v2096
      %v2115 = vpack.c.b16 %v2099, %v2098
      %2132 = vmatprep.subr.bf16.mxu0 0
      %2133 = vmatpush1.bf16.msra.mxu0 %v2107
      %2134 = vmatprep.subr.bf16.mxu0 0
      %2135 = vmatpush1.bf16.msra.mxu0 %v2106
      %2136 = vmatprep.subr.bf16.mxu0 0
      %2137 = vmatpush1.bf16.msra.mxu0 %v2105
      %2138 = vmatprep.subr.bf16.mxu0 0
      %2139 = vmatpush1.bf16.msra.mxu0 %v2104
      %2140 = vmatprep.subr.bf16.mxu0 0
      %2141 = vmatpush1.bf16.msra.mxu0 %v2103
      %2142 = vmatprep.subr.bf16.mxu0 0
      %2143 = vmatpush1.bf16.msra.mxu0 %v2102
      %2144 = vmatprep.subr.bf16.mxu0 0
      %2145 = vmatpush1.bf16.msra.mxu0 %v2101
      %2146 = vmatprep.subr.bf16.mxu0 0
      %2147 = vmatpush1.bf16.msra.mxu0 %v2100
      %2148 = vmatprep.subr.bf16.mxu0 0
      %2149 = vmatpush2.bf16.msra.mxu0 %v2115
      %2150 = vmatprep.subr.bf16.mxu0 0
      %2151 = vmatpush2.bf16.msra.mxu0 %v2114
      %2152 = vmatprep.subr.bf16.mxu0 0
      %2153 = vmatpush2.bf16.msra.mxu0 %v2113
      %2154 = vmatprep.subr.bf16.mxu0 0
      %2155 = vmatpush2.bf16.msra.mxu0 %v2112
      %2156 = vmatprep.subr.bf16.mxu0 0
      %2157 = vmatpush2.bf16.msra.mxu0 %v2111
      %2158 = vmatprep.subr.bf16.mxu0 0
      %2159 = vmatpush2.bf16.msra.mxu0 %v2110
      %2160 = vmatprep.subr.bf16.mxu0 0
      %2161 = vmatpush2.bf16.msra.mxu0 %v2109
      %2162 = vmatprep.subr.bf16.mxu0 0
      %2163 = vmatpush2.bf16.msra.mxu0 %v2108
      %2164 = vmatprep.mubr.bf16.mxu0 %v1982
      %2165 = vmatmul.mubr.bf16.gmra.mxu0 %v1981
      %v2166 = vpop.f32.mrf.mxu0
      %v2167 = vadd.f32 %v2034, %v2166
      %v2168 = vpop.f32.mrf.mxu0
      %v2169 = vpop.f32.mrf.mxu0
      %v2170 = vadd.f32 %v2034, %v2169
      %v2171 = vpop.f32.mrf.mxu0
      %2172 = vmatprep.mubr.bf16.mxu0 %v1984
      %2173 = vmatmul.mubr.bf16.gmra.mxu0 %v1983
      %v2174 = vpop.f32.mrf.mxu0
      %v2175 = vadd.f32 %v2034, %v2174
      %v2176 = vpop.f32.mrf.mxu0
      %v2177 = vpop.f32.mrf.mxu0
      %v2178 = vadd.f32 %v2034, %v2177
      %v2179 = vpop.f32.mrf.mxu0
      %2180 = vmatprep.mubr.bf16.mxu0 %v1986
      %2181 = vmatmul.mubr.bf16.gmra.mxu0 %v1985
      %v2182 = vpop.f32.mrf.mxu0
      %v2183 = vadd.f32 %v2034, %v2182
      %v2184 = vpop.f32.mrf.mxu0
      %v2185 = vpop.f32.mrf.mxu0
      %v2186 = vadd.f32 %v2034, %v2185
      %v2187 = vpop.f32.mrf.mxu0
      %2188 = vmatprep.mubr.bf16.mxu0 %v1988
      %2189 = vmatmul.mubr.bf16.gmra.mxu0 %v1987
      %v2190 = vpop.f32.mrf.mxu0
      %v2191 = vadd.f32 %v2034, %v2190
      %v2192 = vpop.f32.mrf.mxu0
      %v2193 = vpop.f32.mrf.mxu0
      %v2194 = vadd.f32 %v2034, %v2193
      %v2195 = vpop.f32.mrf.mxu0
      %2196 = vmatprep.mubr.bf16.mxu0 %v1990
      %2197 = vmatmul.mubr.bf16.gmra.mxu0 %v1989
      %v2198 = vpop.f32.mrf.mxu0
      %v2199 = vadd.f32 %v2034, %v2198
      %v2200 = vpop.f32.mrf.mxu0
      %v2201 = vpop.f32.mrf.mxu0
      %v2202 = vadd.f32 %v2034, %v2201
      %v2203 = vpop.f32.mrf.mxu0
      %2204 = vmatprep.mubr.bf16.mxu0 %v1992
      %2205 = vmatmul.mubr.bf16.gmra.mxu0 %v1991
      %v2206 = vpop.f32.mrf.mxu0
      %v2207 = vadd.f32 %v2034, %v2206
      %v2208 = vpop.f32.mrf.mxu0
      %v2209 = vpop.f32.mrf.mxu0
      %v2210 = vadd.f32 %v2034, %v2209
      %v2211 = vpop.f32.mrf.mxu0
      %2212 = vmatprep.mubr.bf16.mxu0 %v1994
      %2213 = vmatmul.mubr.bf16.gmra.mxu0 %v1993
      %v2214 = vpop.f32.mrf.mxu0
      %v2215 = vadd.f32 %v2034, %v2214
      %v2216 = vpop.f32.mrf.mxu0
      %v2217 = vpop.f32.mrf.mxu0
      %v2218 = vadd.f32 %v2034, %v2217
      %v2219 = vpop.f32.mrf.mxu0
      %2220 = vmatprep.mubr.bf16.mxu0 %v1996
      %2221 = vmatmul.mubr.bf16.gmra.mxu0 %v1995
      %v2222 = vpop.f32.mrf.mxu0
      %v2223 = vadd.f32 %v2034, %v2222
      %v2224 = vpop.f32.mrf.mxu0
      %v2225 = vpop.f32.mrf.mxu0
      %v2226 = vadd.f32 %v2034, %v2225
      %v2227 = vpop.f32.mrf.mxu0
      %2228 = vdwg.mxu0
      %v2229 = vmax.f32 %v2167, 0.0
      %v2230 = vmax.f32 %v2170, 0.0
      %v2231 = vmax.f32 %v2175, 0.0
      %v2232 = vmax.f32 %v2178, 0.0
      %v2233 = vmax.f32 %v2183, 0.0
      %v2234 = vmax.f32 %v2186, 0.0
      %v2235 = vmax.f32 %v2191, 0.0
      %v2236 = vmax.f32 %v2194, 0.0
      %v2237 = vmax.f32 %v2199, 0.0
      %v2238 = vmax.f32 %v2202, 0.0
      %v2239 = vmax.f32 %v2207, 0.0
      %v2240 = vmax.f32 %v2210, 0.0
      %v2241 = vmax.f32 %v2215, 0.0
      %v2242 = vmax.f32 %v2218, 0.0
      %v2243 = vmax.f32 %v2223, 0.0
      %v2244 = vmax.f32 %v2226, 0.0
      %v2245 = vld [vmem:[%s10] sm:$0x1]
      %v2247 = vlaneseq
      %v2248 = vshrl.u32 %v2247, 7
      %v2249 = vsub.s32 0, %v2248
      %v2250 = vrot.slane %v2245, %v2249
      %v2252 = vmul.f32 %v2229, %v2250
      %v2253 = vmul.f32 %v2230, %v2250
      %v2254 = vmul.f32 %v2231, %v2250
      %v2255 = vmul.f32 %v2232, %v2250
      %v2256 = vmul.f32 %v2233, %v2250
      %v2257 = vmul.f32 %v2234, %v2250
      %v2258 = vmul.f32 %v2235, %v2250
      %v2259 = vmul.f32 %v2236, %v2250
      %v2260 = vmul.f32 %v2237, %v2250
      %v2261 = vmul.f32 %v2238, %v2250
      %v2262 = vmul.f32 %v2239, %v2250
      %v2263 = vmul.f32 %v2240, %v2250
      %v2264 = vmul.f32 %v2241, %v2250
      %v2265 = vmul.f32 %v2242, %v2250
      %v2266 = vmul.f32 %v2243, %v2250
      %v2267 = vmul.f32 %v2244, %v2250
      %2268 = vadd.xlane.f32.xlu0 %v2252
      %v2269 = vpop.xlane.xlu0 %2268
      %2270 = vadd.xlane.f32.xlu0 %v2253
      %v2271 = vpop.xlane.xlu0 %2270
      %2272 = vadd.xlane.f32.xlu0 %v2254
      %v2273 = vpop.xlane.xlu0 %2272
      %2274 = vadd.xlane.f32.xlu0 %v2255
      %v2275 = vpop.xlane.xlu0 %2274
      %2276 = vadd.xlane.f32.xlu0 %v2256
      %v2277 = vpop.xlane.xlu0 %2276
      %2278 = vadd.xlane.f32.xlu0 %v2257
      %v2279 = vpop.xlane.xlu0 %2278
      %2280 = vadd.xlane.f32.xlu0 %v2258
      %v2281 = vpop.xlane.xlu0 %2280
      %2282 = vadd.xlane.f32.xlu0 %v2259
      %v2283 = vpop.xlane.xlu0 %2282
      %2284 = vadd.xlane.f32.xlu0 %v2260
      %v2285 = vpop.xlane.xlu0 %2284
      %2286 = vadd.xlane.f32.xlu0 %v2261
      %v2287 = vpop.xlane.xlu0 %2286
      %2288 = vadd.xlane.f32.xlu0 %v2262
      %v2289 = vpop.xlane.xlu0 %2288
      %2290 = vadd.xlane.f32.xlu0 %v2263
      %v2291 = vpop.xlane.xlu0 %2290
      %2292 = vadd.xlane.f32.xlu0 %v2264
      %v2293 = vpop.xlane.xlu0 %2292
      %2294 = vadd.xlane.f32.xlu0 %v2265
      %v2295 = vpop.xlane.xlu0 %2294
      %2296 = vadd.xlane.f32.xlu0 %v2266
      %v2297 = vpop.xlane.xlu0 %2296
      %2298 = vadd.xlane.f32.xlu0 %v2267
      %v2299 = vpop.xlane.xlu0 %2298
      %v2300 = vld [vmem:[#allocation2] sm:$0x1]
      %v2302 = vlaneseq
      %v2303 = vshrl.u32 %v2302, 7
      %v2304 = vsub.s32 0, %v2303
      %v2305 = vrot.slane %v2300, %v2304
      %v2307 = vadd.f32 %v2269, %v2305
      %v2308 = vadd.f32 %v2271, %v2305
      %v2309 = vadd.f32 %v2273, %v2305
      %v2310 = vadd.f32 %v2275, %v2305
      %v2311 = vadd.f32 %v2277, %v2305
      %v2312 = vadd.f32 %v2279, %v2305
      %v2313 = vadd.f32 %v2281, %v2305
      %v2314 = vadd.f32 %v2283, %v2305
      %v2315 = vadd.f32 %v2285, %v2305
      %v2316 = vadd.f32 %v2287, %v2305
      %v2317 = vadd.f32 %v2289, %v2305
      %v2318 = vadd.f32 %v2291, %v2305
      %v2319 = vadd.f32 %v2293, %v2305
      %v2320 = vadd.f32 %v2295, %v2305
      %v2321 = vadd.f32 %v2297, %v2305
      %v2322 = vadd.f32 %v2299, %v2305
      %vm2323 = vcmask 7168
      %2324 = vst.msk [vmem:[%s482] sm:$0xff] %vm2323, %v2307
      %2325 = vst.msk [vmem:[%s482 + $0x8] sm:$0xff] %vm2323, %v2308
      %2326 = vst.msk [vmem:[%s482 + $0x10] sm:$0xff] %vm2323, %v2309
      %2327 = vst.msk [vmem:[%s482 + $0x18] sm:$0xff] %vm2323, %v2310
      %2328 = vst.msk [vmem:[%s482 + $0x20] sm:$0xff] %vm2323, %v2311
      %2329 = vst.msk [vmem:[%s482 + $0x28] sm:$0xff] %vm2323, %v2312
      %2330 = vst.msk [vmem:[%s482 + $0x30] sm:$0xff] %vm2323, %v2313
      %2331 = vst.msk [vmem:[%s482 + $0x38] sm:$0xff] %vm2323, %v2314
      %2332 = vst.msk [vmem:[%s482 + $0x40] sm:$0xff] %vm2323, %v2315
      %2333 = vst.msk [vmem:[%s482 + $0x48] sm:$0xff] %vm2323, %v2316
      %2334 = vst.msk [vmem:[%s482 + $0x50] sm:$0xff] %vm2323, %v2317
      %2335 = vst.msk [vmem:[%s482 + $0x58] sm:$0xff] %vm2323, %v2318
      %2336 = vst.msk [vmem:[%s482 + $0x60] sm:$0xff] %vm2323, %v2319
      %2337 = vst.msk [vmem:[%s482 + $0x68] sm:$0xff] %vm2323, %v2320
      %2338 = vst.msk [vmem:[%s482 + $0x70] sm:$0xff] %vm2323, %v2321
      %2339 = vst.msk [vmem:[%s482 + $0x78] sm:$0xff] %vm2323, %v2322
      %s2340 = smul.u32 16, %s27
      %p2341 = scmp.lt.s32.totalorder %s2340, 31
      %s2342 = scalar_select %p2341, %s2340, 31
      %s2343 = smul.addr %s2342, 2
      %s2344 = smul.addr %s2343, 8
      %s2345 = scalar_lea.vmem %s12, %s2344
      %s2346 = smul.u32 16, %s27
      %p2347 = scmp.lt.s32.totalorder %s2346, 31
      %s2348 = scalar_select %p2347, %s2346, 31
      %s2349 = smul.addr %s2348, 8
      %s2350 = scalar_lea.vmem %s13, %s2349
      // Predicated region
      $region69: #{basemodel_forward.1} parent=67 // pred_check
        %p2351 = pneg %p307
      $region70: #{basemodel_forward.1} parent=67 // pred_check_branch
        %2353 = sbr.rel (%p2351) target = $region72
      $region71: #{basemodel_forward.1} parent=67 // pred_region
        %s2354 = smul.u32 16, %s27
      $region72: #{basemodel_forward.1} parent=67 // pred_fallthru
        _
      // Predicated region
      $region73: #{basemodel_forward.1} parent=67 // pred_check
        %p2355 = pneg %p333
      $region74: #{basemodel_forward.1} parent=67 // pred_check_branch
        %2357 = sbr.rel (%p2355) target = $region76
      $region75: #{basemodel_forward.1} parent=67 // pred_region
        %s2358 = smul.u32 16, %s27
      $region76: #{basemodel_forward.1} parent=67 // pred_fallthru
        _
    $region68: #{basemodel_forward.1} parent=5 // pred_fallthru
      _
    %p2359 = scmp.le.s32.totalorder 2, %s22
    // Predicated region
    $region77: #{basemodel_forward.1} parent=5 // pred_check
      %p2360 = pneg %p2359
    $region78: #{basemodel_forward.1} parent=5 // pred_check_branch
      %2362 = sbr.rel (%p2360) target = $region80
    $region79: #{basemodel_forward.1} parent=5 // pred_region
      %s2363 = ssub.s32 %s22, 2
      // Predicated region
      $region81: #{basemodel_forward.1} parent=79 // pred_check
        %p2364 = pneg %p313
      $region82: #{basemodel_forward.1} parent=79 // pred_check_branch
        %2366 = sbr.rel (%p2364) target = $region84
      $region83: #{basemodel_forward.1} parent=79 // pred_region
        %s2367 = smul.u32 16, %s28
        %p2368 = scmp.lt.s32.totalorder %s2367, 31
        %s2369 = scalar_select %p2368, %s2367, 31
        %s2370 = smul.addr %s2369, 2
        %s2371 = smul.addr %s2370, 8
        %s2372 = scalar_lea.vmem %s12, %s2371
      $region84: #{basemodel_forward.1} parent=79 // pred_fallthru
        _
      // Predicated region
      $region85: #{basemodel_forward.1} parent=79 // pred_check
        %p2373 = pneg %p339
      $region86: #{basemodel_forward.1} parent=79 // pred_check_branch
        %2375 = sbr.rel (%p2373) target = $region88
      $region87: #{basemodel_forward.1} parent=79 // pred_region
        %s2376 = smul.u32 16, %s28
        %p2377 = scmp.lt.s32.totalorder %s2376, 31
        %s2378 = scalar_select %p2377, %s2376, 31
        %s2379 = smul.addr %s2378, 8
        %s2380 = scalar_lea.vmem %s13, %s2379
      $region88: #{basemodel_forward.1} parent=79 // pred_fallthru
        _
    $region80: #{basemodel_forward.1} parent=5 // pred_fallthru
      _
  $region6: #{basemodel_forward.1} parent=0 // loop_footer
    %s26 = sadd.s32 1, %s22
  $region7: #{basemodel_forward.1} parent=0 // loop_footer_branch
    %21 = sbr.rel target = $region3
  $region8: #{basemodel_forward.1} parent=0 // loop_exit
    _

</llo_original>
